<compile_context>
chip_gen: v7x
topology: tpu7x:2x2x1
jax: 0.10.0
libtpu: 0.0.40
codegen_flags: <defaults>
</compile_context>

<pallas_src>
import jax
import jax.numpy as jnp
from jax.experimental import pallas as pl
from jax.experimental.pallas import tpu as pltpu


def _gru_decoder_kernel(
    x_ref,       # (B, T, Z)   batch-first inputs
    w_icat_ref,  # (Z, 3H)     [W_ir | W_iz | W_in]
    w_hcat_ref,  # (H, 3H)     [W_hr | W_hz | W_hn]
    b_x_ref,     # (1, 3H)     [b_ir+b_hr | b_iz+b_hz | b_in]
    b_hn_ref,    # (1, H)      b_hn (must stay inside the r-gated term)
    w_out_ref,   # (H, F)
    b_out_ref,   # (1, F)
    o_ref,       # (B, T, F)   batch-first outputs
    xi_ref,      # (T, B, 3H)  VMEM scratch: hoisted input projections
    hs_ref,      # (T, B, H)   VMEM scratch: hidden-state history
):
    B, T, _ = x_ref.shape
    H = w_hcat_ref.shape[0]

    # ---- Hoisted input projection (no serial dependence on h). ----
    w_icat = w_icat_ref[...]
    b_x = b_x_ref[...]
    for b in range(B):  # B is tiny and static; 2D matmuls keep Mosaic lowering simple
        xi_b = (
            jnp.dot(x_ref[b], w_icat, preferred_element_type=jnp.float32) + b_x
        )  # (T, 3H)
        xi_ref[:, b:b + 1, :] = xi_b[:, None, :]

    # ---- Serial GRU recurrence: one fused h @ (H,3H) matmul per step. ----
    w_hcat = w_hcat_ref[...]
    b_hn = b_hn_ref[...]
    H2 = 2 * H

    def step(t, h):
        xi_t = xi_ref[t]                                                   # (B, 3H)
        hh = jnp.dot(h, w_hcat, preferred_element_type=jnp.float32)        # (B, 3H)
        # r and z share one 2H-wide sigmoid (single EUP op, wider lanes).
        rz = jax.nn.sigmoid(xi_t[:, 0:H2] + hh[:, 0:H2])                   # (B, 2H)
        r = rz[:, 0:H]
        z = rz[:, H:H2]
        n = jnp.tanh(xi_t[:, H2:] + r * (hh[:, H2:] + b_hn))
        h_new = n + z * (h - n)      # == (1 - z) * n + z * h, one fewer vmul
        hs_ref[t] = h_new
        return h_new

    jax.lax.fori_loop(0, T, step, jnp.zeros((B, H), jnp.float32), unroll=True)

    # ---- Deferred output projection: bulk matmul + one store per batch row. ----
    hs = hs_ref[...]                                                        # (T, B, H)
    w_out = w_out_ref[...]
    b_out = b_out_ref[...]
    for b in range(B):
        o_ref[b] = (
            jnp.dot(hs[:, b, :], w_out, preferred_element_type=jnp.float32) + b_out
        )


def decoder_legacy_forward(inputs_btz, params):
    """inputs_btz: (B, T, Z) float32 -> (B, T, F) float32 (batch_first, like the module)."""
    B, T, Z = inputs_btz.shape
    H = params["w_hr"].shape[0]
    F = params["w_out"].shape[1]

    # Fuse gate weights / merge biases once in the wrapper (tiny XLA ops, jit-fused).
    # Only b_ir+b_hr and b_iz+b_hz may be pre-summed; b_hn stays separate (r-gated).
    w_icat = jnp.concatenate([params["w_ir"], params["w_iz"], params["w_in"]], axis=1)  # (Z, 3H)
    w_hcat = jnp.concatenate([params["w_hr"], params["w_hz"], params["w_hn"]], axis=1)  # (H, 3H)
    b_x = jnp.concatenate(
        [params["b_ir"] + params["b_hr"],
         params["b_iz"] + params["b_hz"],
         params["b_in"]],
        axis=1,
    )                                                                                    # (1, 3H)

    vmem = pl.BlockSpec(memory_space=pltpu.MemorySpace.VMEM)

    return pl.pallas_call(
        _gru_decoder_kernel,
        out_shape=jax.ShapeDtypeStruct((B, T, F), jnp.float32),
        in_specs=[vmem] * 7,
        out_specs=vmem,
        scratch_shapes=[
            pltpu.VMEM((T, B, 3 * H), jnp.float32),   # hoisted input projections
            pltpu.VMEM((T, B, H), jnp.float32),       # hidden-state history
        ],
    )(inputs_btz, w_icat, w_hcat, b_x, params["b_hn"], params["w_out"], params["b_out"])


def init_params(key, zdims, hidden_size, num_features):
    """Deterministic init mimicking PyTorch's U(-1/sqrt(H), 1/sqrt(H))."""
    k = 1.0 / jnp.sqrt(jnp.float32(hidden_size))
    names_shapes = [
        ("w_ir", (zdims, hidden_size)), ("w_iz", (zdims, hidden_size)),
        ("w_in", (zdims, hidden_size)),
        ("w_hr", (hidden_size, hidden_size)), ("w_hz", (hidden_size, hidden_size)),
        ("w_hn", (hidden_size, hidden_size)),
        ("b_ir", (1, hidden_size)), ("b_iz", (1, hidden_size)),
        ("b_in", (1, hidden_size)),
        ("b_hr", (1, hidden_size)), ("b_hz", (1, hidden_size)),
        ("b_hn", (1, hidden_size)),
        ("w_out", (hidden_size, num_features)), ("b_out", (1, num_features)),
    ]
    keys = jax.random.split(key, len(names_shapes))
    params = {}
    for (name, shape), kk in zip(names_shapes, keys):
        params[name] = jax.random.uniform(
            kk, shape, dtype=jnp.float32, minval=-k, maxval=k
        )
    return params


def reference_forward(inputs_btz, p):
    """Pure-JAX reference (lax.scan, unfused weights) for validation."""
    x_tbz = jnp.transpose(inputs_btz, (1, 0, 2))
    B = inputs_btz.shape[0]
    H = p["w_hr"].shape[0]
    h0 = jnp.zeros((B, H), jnp.float32)

    def step(h, x):
        r = jax.nn.sigmoid(x @ p["w_ir"] + p["b_ir"] + h @ p["w_hr"] + p["b_hr"])
        z = jax.nn.sigmoid(x @ p["w_iz"] + p["b_iz"] + h @ p["w_hz"] + p["b_hz"])
        n = jnp.tanh(x @ p["w_in"] + p["b_in"] + r * (h @ p["w_hn"] + p["b_hn"]))
        h_new = (1.0 - z) * n + z * h
        y = h_new @ p["w_out"] + p["b_out"]
        return h_new, y

    _, y_tbf = jax.lax.scan(step, h0, x_tbz)
    return jnp.transpose(y_tbf, (1, 0, 2))


if __name__ == "__main__":
    # Hyper-params consistent with Decoder_LEGACY.__init__.
    TEMPORAL_WINDOW = 8   # sequence length T
    ZDIMS = 4             # latent dim Z
    NUM_FEATURES = 12     # output features F
    HIDDEN_SIZE_REC = 32  # GRU hidden size H
    BATCH = 2

    key = jax.random.PRNGKey(0)
    k_params, k_x = jax.random.split(key)
    params = init_params(k_params, ZDIMS, HIDDEN_SIZE_REC, NUM_FEATURES)

    # Decoder input: latent sequence, batch_first (B, T, Z) like the PyTorch module.
    x = jax.random.normal(k_x, (BATCH, TEMPORAL_WINDOW, ZDIMS), dtype=jnp.float32)

    fwd = jax.jit(decoder_legacy_forward)
    out = fwd(x, params)
    jax.block_until_ready(out)

    ref = reference_forward(x, params)
    assert out.shape == (BATCH, TEMPORAL_WINDOW, NUM_FEATURES)
    assert jnp.allclose(out, ref, atol=1e-5, rtol=1e-5), "mismatch vs JAX reference"

    print("KERNEL_OK")
</pallas_src>

<mosaic_0001>
module attributes {stable_mosaic.version = 11 : i64} {
  func.func @_gru_decoder_kernel(%arg0: memref<2x8x4xf32, #tpu.memory_space<vmem>>, %arg1: memref<4x96xf32, #tpu.memory_space<vmem>>, %arg2: memref<32x96xf32, #tpu.memory_space<vmem>>, %arg3: memref<1x96xf32, #tpu.memory_space<vmem>>, %arg4: memref<1x32xf32, #tpu.memory_space<vmem>>, %arg5: memref<32x12xf32, #tpu.memory_space<vmem>>, %arg6: memref<1x12xf32, #tpu.memory_space<vmem>>, %arg7: memref<2x8x12xf32, #tpu.memory_space<vmem>>, %arg8: memref<8x2x96xf32, #tpu.memory_space<vmem>>, %arg9: memref<8x2x32xf32, #tpu.memory_space<vmem>>) attributes {dimension_semantics = [], scalar_prefetch = 0 : i64, scratch_operands = 2 : i64, tpu.core_type = #tpu.core_type<tc>} {
    %c0 = arith.constant 0 : index
    %c0_0 = arith.constant 0 : index
    %0 = vector.load %arg1[%c0, %c0_0] : memref<4x96xf32, #tpu.memory_space<vmem>>, vector<4x96xf32>
    %c0_1 = arith.constant 0 : index
    %c0_2 = arith.constant 0 : index
    %1 = vector.load %arg3[%c0_1, %c0_2] : memref<1x96xf32, #tpu.memory_space<vmem>>, vector<1x96xf32>
    %c0_3 = arith.constant 0 : index
    %c0_4 = arith.constant 0 : index
    %c0_5 = arith.constant 0 : index
    %2 = vector.load %arg0[%c0_3, %c0_4, %c0_5] : memref<2x8x4xf32, #tpu.memory_space<vmem>>, vector<1x8x4xf32>
    %3 = vector.shape_cast %2 : vector<1x8x4xf32> to vector<8x4xf32>
    %cst = arith.constant dense<0.000000e+00> : vector<8x96xf32>
    %4 = tpu.matmul %3, %0, %cst {dimension_numbers = #tpu.dot_dimension_numbers<[1], [0], [0], [1], [0, 0, 1, 1], [], []>} : vector<8x4xf32>, vector<4x96xf32>, vector<8x96xf32> -> vector<8x96xf32>
    %5 = vector.broadcast %1 : vector<1x96xf32> to vector<8x96xf32>
    %6 = arith.addf %4, %5 : vector<8x96xf32>
    %7 = vector.shape_cast %6 : vector<8x96xf32> to vector<8x1x96xf32>
    %c0_6 = arith.constant 0 : index
    %c0_7 = arith.constant 0 : index
    %c0_8 = arith.constant 0 : index
    %8 = vector.load %arg8[%c0_6, %c0_7, %c0_8] : memref<8x2x96xf32, #tpu.memory_space<vmem>>, vector<8x1x96xf32>
    tpu.vector_store %arg8[%c0_6, %c0_7, %c0_8], %7 {strides = array<i32>} : memref<8x2x96xf32, #tpu.memory_space<vmem>>, vector<8x1x96xf32>,
    %c1 = arith.constant 1 : index
    %c0_9 = arith.constant 0 : index
    %c0_10 = arith.constant 0 : index
    %9 = vector.load %arg0[%c1, %c0_9, %c0_10] : memref<2x8x4xf32, #tpu.memory_space<vmem>>, vector<1x8x4xf32>
    %10 = vector.shape_cast %9 : vector<1x8x4xf32> to vector<8x4xf32>
    %cst_11 = arith.constant dense<0.000000e+00> : vector<8x96xf32>
    %11 = tpu.matmul %10, %0, %cst_11 {dimension_numbers = #tpu.dot_dimension_numbers<[1], [0], [0], [1], [0, 0, 1, 1], [], []>} : vector<8x4xf32>, vector<4x96xf32>, vector<8x96xf32> -> vector<8x96xf32>
    %12 = vector.broadcast %1 : vector<1x96xf32> to vector<8x96xf32>
    %13 = arith.addf %11, %12 : vector<8x96xf32>
    %14 = vector.shape_cast %13 : vector<8x96xf32> to vector<8x1x96xf32>
    %c0_12 = arith.constant 0 : index
    %c1_13 = arith.constant 1 : index
    %c0_14 = arith.constant 0 : index
    %15 = vector.load %arg8[%c0_12, %c1_13, %c0_14] : memref<8x2x96xf32, #tpu.memory_space<vmem>>, vector<8x1x96xf32>
    tpu.vector_store %arg8[%c0_12, %c1_13, %c0_14], %14 {strides = array<i32>} : memref<8x2x96xf32, #tpu.memory_space<vmem>>, vector<8x1x96xf32>,
    %c0_15 = arith.constant 0 : index
    %c0_16 = arith.constant 0 : index
    %16 = vector.load %arg2[%c0_15, %c0_16] : memref<32x96xf32, #tpu.memory_space<vmem>>, vector<32x96xf32>
    %c0_17 = arith.constant 0 : index
    %c0_18 = arith.constant 0 : index
    %17 = vector.load %arg4[%c0_17, %c0_18] : memref<1x32xf32, #tpu.memory_space<vmem>>, vector<1x32xf32>
    %cst_19 = arith.constant 0.000000e+00 : f32
    %18 = vector.broadcast %cst_19 : f32 to vector<2x32xf32>
    %c0_i32 = arith.constant 0 : i32
    %19 = arith.index_cast %c0_i32 : i32 to index
    %c0_20 = arith.constant 0 : index
    %c0_21 = arith.constant 0 : index
    %20 = vector.load %arg8[%19, %c0_20, %c0_21] : memref<8x2x96xf32, #tpu.memory_space<vmem>>, vector<1x2x96xf32>
    %21 = vector.shape_cast %20 : vector<1x2x96xf32> to vector<2x96xf32>
    %cst_22 = arith.constant dense<0.000000e+00> : vector<2x96xf32>
    %22 = tpu.matmul %18, %16, %cst_22 {dimension_numbers = #tpu.dot_dimension_numbers<[1], [0], [0], [1], [0, 0, 1, 1], [], []>} : vector<2x32xf32>, vector<32x96xf32>, vector<2x96xf32> -> vector<2x96xf32>
    %23 = vector.extract_strided_slice %21 {offsets = [0, 0], sizes = [2, 64], strides = [1, 1]} : vector<2x96xf32> to vector<2x64xf32>
    %24 = vector.extract_strided_slice %22 {offsets = [0, 0], sizes = [2, 64], strides = [1, 1]} : vector<2x96xf32> to vector<2x64xf32>
    %25 = arith.addf %23, %24 : vector<2x64xf32>
    %26 = arith.negf %25 : vector<2x64xf32>
    %27 = math.exp %26 : vector<2x64xf32>
    %cst_23 = arith.constant 1.000000e+00 : f32
    %28 = vector.broadcast %cst_23 : f32 to vector<2x64xf32>
    %29 = arith.addf %28, %27 : vector<2x64xf32>
    %30 = arith.divf %28, %29 : vector<2x64xf32>
    %31 = vector.extract_strided_slice %30 {offsets = [0, 0], sizes = [2, 32], strides = [1, 1]} : vector<2x64xf32> to vector<2x32xf32>
    %32 = vector.extract_strided_slice %30 {offsets = [0, 32], sizes = [2, 32], strides = [1, 1]} : vector<2x64xf32> to vector<2x32xf32>
    %33 = vector.extract_strided_slice %21 {offsets = [0, 64], sizes = [2, 32], strides = [1, 1]} : vector<2x96xf32> to vector<2x32xf32>
    %34 = vector.extract_strided_slice %22 {offsets = [0, 64], sizes = [2, 32], strides = [1, 1]} : vector<2x96xf32> to vector<2x32xf32>
    %35 = vector.broadcast %17 : vector<1x32xf32> to vector<2x32xf32>
    %36 = arith.addf %34, %35 : vector<2x32xf32>
    %37 = arith.mulf %31, %36 : vector<2x32xf32>
    %38 = arith.addf %33, %37 : vector<2x32xf32>
    %39 = math.tanh %38 : vector<2x32xf32>
    %40 = arith.subf %18, %39 : vector<2x32xf32>
    %41 = arith.mulf %32, %40 : vector<2x32xf32>
    %42 = arith.addf %39, %41 : vector<2x32xf32>
    %43 = arith.index_cast %c0_i32 : i32 to index
    %c0_24 = arith.constant 0 : index
    %c0_25 = arith.constant 0 : index
    %44 = vector.load %arg9[%43, %c0_24, %c0_25] : memref<8x2x32xf32, #tpu.memory_space<vmem>>, vector<1x2x32xf32>
    %45 = vector.shape_cast %44 : vector<1x2x32xf32> to vector<2x32xf32>
    %46 = vector.shape_cast %42 : vector<2x32xf32> to vector<1x2x32xf32>
    tpu.vector_store %arg9[%43, %c0_24, %c0_25], %46 {strides = array<i32>} : memref<8x2x32xf32, #tpu.memory_space<vmem>>, vector<1x2x32xf32>,
    %c1_i32 = arith.constant 1 : i32
    %47 = arith.index_cast %c1_i32 : i32 to index
    %c0_26 = arith.constant 0 : index
    %c0_27 = arith.constant 0 : index
    %48 = vector.load %arg8[%47, %c0_26, %c0_27] : memref<8x2x96xf32, #tpu.memory_space<vmem>>, vector<1x2x96xf32>
    %49 = vector.shape_cast %48 : vector<1x2x96xf32> to vector<2x96xf32>
    %cst_28 = arith.constant dense<0.000000e+00> : vector<2x96xf32>
    %50 = tpu.matmul %42, %16, %cst_28 {dimension_numbers = #tpu.dot_dimension_numbers<[1], [0], [0], [1], [0, 0, 1, 1], [], []>} : vector<2x32xf32>, vector<32x96xf32>, vector<2x96xf32> -> vector<2x96xf32>
    %51 = vector.extract_strided_slice %49 {offsets = [0, 0], sizes = [2, 64], strides = [1, 1]} : vector<2x96xf32> to vector<2x64xf32>
    %52 = vector.extract_strided_slice %50 {offsets = [0, 0], sizes = [2, 64], strides = [1, 1]} : vector<2x96xf32> to vector<2x64xf32>
    %53 = arith.addf %51, %52 : vector<2x64xf32>
    %54 = arith.negf %53 : vector<2x64xf32>
    %55 = math.exp %54 : vector<2x64xf32>
    %cst_29 = arith.constant 1.000000e+00 : f32
    %56 = vector.broadcast %cst_29 : f32 to vector<2x64xf32>
    %57 = arith.addf %56, %55 : vector<2x64xf32>
    %58 = arith.divf %56, %57 : vector<2x64xf32>
    %59 = vector.extract_strided_slice %58 {offsets = [0, 0], sizes = [2, 32], strides = [1, 1]} : vector<2x64xf32> to vector<2x32xf32>
    %60 = vector.extract_strided_slice %58 {offsets = [0, 32], sizes = [2, 32], strides = [1, 1]} : vector<2x64xf32> to vector<2x32xf32>
    %61 = vector.extract_strided_slice %49 {offsets = [0, 64], sizes = [2, 32], strides = [1, 1]} : vector<2x96xf32> to vector<2x32xf32>
    %62 = vector.extract_strided_slice %50 {offsets = [0, 64], sizes = [2, 32], strides = [1, 1]} : vector<2x96xf32> to vector<2x32xf32>
    %63 = vector.broadcast %17 : vector<1x32xf32> to vector<2x32xf32>
    %64 = arith.addf %62, %63 : vector<2x32xf32>
    %65 = arith.mulf %59, %64 : vector<2x32xf32>
    %66 = arith.addf %61, %65 : vector<2x32xf32>
    %67 = math.tanh %66 : vector<2x32xf32>
    %68 = arith.subf %42, %67 : vector<2x32xf32>
    %69 = arith.mulf %60, %68 : vector<2x32xf32>
    %70 = arith.addf %67, %69 : vector<2x32xf32>
    %71 = arith.index_cast %c1_i32 : i32 to index
    %c0_30 = arith.constant 0 : index
    %c0_31 = arith.constant 0 : index
    %72 = vector.load %arg9[%71, %c0_30, %c0_31] : memref<8x2x32xf32, #tpu.memory_space<vmem>>, vector<1x2x32xf32>
    %73 = vector.shape_cast %72 : vector<1x2x32xf32> to vector<2x32xf32>
    %74 = vector.shape_cast %70 : vector<2x32xf32> to vector<1x2x32xf32>
    tpu.vector_store %arg9[%71, %c0_30, %c0_31], %74 {strides = array<i32>} : memref<8x2x32xf32, #tpu.memory_space<vmem>>, vector<1x2x32xf32>,
    %c2_i32 = arith.constant 2 : i32
    %75 = arith.index_cast %c2_i32 : i32 to index
    %c0_32 = arith.constant 0 : index
    %c0_33 = arith.constant 0 : index
    %76 = vector.load %arg8[%75, %c0_32, %c0_33] : memref<8x2x96xf32, #tpu.memory_space<vmem>>, vector<1x2x96xf32>
    %77 = vector.shape_cast %76 : vector<1x2x96xf32> to vector<2x96xf32>
    %cst_34 = arith.constant dense<0.000000e+00> : vector<2x96xf32>
    %78 = tpu.matmul %70, %16, %cst_34 {dimension_numbers = #tpu.dot_dimension_numbers<[1], [0], [0], [1], [0, 0, 1, 1], [], []>} : vector<2x32xf32>, vector<32x96xf32>, vector<2x96xf32> -> vector<2x96xf32>
    %79 = vector.extract_strided_slice %77 {offsets = [0, 0], sizes = [2, 64], strides = [1, 1]} : vector<2x96xf32> to vector<2x64xf32>
    %80 = vector.extract_strided_slice %78 {offsets = [0, 0], sizes = [2, 64], strides = [1, 1]} : vector<2x96xf32> to vector<2x64xf32>
    %81 = arith.addf %79, %80 : vector<2x64xf32>
    %82 = arith.negf %81 : vector<2x64xf32>
    %83 = math.exp %82 : vector<2x64xf32>
    %cst_35 = arith.constant 1.000000e+00 : f32
    %84 = vector.broadcast %cst_35 : f32 to vector<2x64xf32>
    %85 = arith.addf %84, %83 : vector<2x64xf32>
    %86 = arith.divf %84, %85 : vector<2x64xf32>
    %87 = vector.extract_strided_slice %86 {offsets = [0, 0], sizes = [2, 32], strides = [1, 1]} : vector<2x64xf32> to vector<2x32xf32>
    %88 = vector.extract_strided_slice %86 {offsets = [0, 32], sizes = [2, 32], strides = [1, 1]} : vector<2x64xf32> to vector<2x32xf32>
    %89 = vector.extract_strided_slice %77 {offsets = [0, 64], sizes = [2, 32], strides = [1, 1]} : vector<2x96xf32> to vector<2x32xf32>
    %90 = vector.extract_strided_slice %78 {offsets = [0, 64], sizes = [2, 32], strides = [1, 1]} : vector<2x96xf32> to vector<2x32xf32>
    %91 = vector.broadcast %17 : vector<1x32xf32> to vector<2x32xf32>
    %92 = arith.addf %90, %91 : vector<2x32xf32>
    %93 = arith.mulf %87, %92 : vector<2x32xf32>
    %94 = arith.addf %89, %93 : vector<2x32xf32>
    %95 = math.tanh %94 : vector<2x32xf32>
    %96 = arith.subf %70, %95 : vector<2x32xf32>
    %97 = arith.mulf %88, %96 : vector<2x32xf32>
    %98 = arith.addf %95, %97 : vector<2x32xf32>
    %99 = arith.index_cast %c2_i32 : i32 to index
    %c0_36 = arith.constant 0 : index
    %c0_37 = arith.constant 0 : index
    %100 = vector.load %arg9[%99, %c0_36, %c0_37] : memref<8x2x32xf32, #tpu.memory_space<vmem>>, vector<1x2x32xf32>
    %101 = vector.shape_cast %100 : vector<1x2x32xf32> to vector<2x32xf32>
    %102 = vector.shape_cast %98 : vector<2x32xf32> to vector<1x2x32xf32>
    tpu.vector_store %arg9[%99, %c0_36, %c0_37], %102 {strides = array<i32>} : memref<8x2x32xf32, #tpu.memory_space<vmem>>, vector<1x2x32xf32>,
    %c3_i32 = arith.constant 3 : i32
    %103 = arith.index_cast %c3_i32 : i32 to index
    %c0_38 = arith.constant 0 : index
    %c0_39 = arith.constant 0 : index
    %104 = vector.load %arg8[%103, %c0_38, %c0_39] : memref<8x2x96xf32, #tpu.memory_space<vmem>>, vector<1x2x96xf32>
    %105 = vector.shape_cast %104 : vector<1x2x96xf32> to vector<2x96xf32>
    %cst_40 = arith.constant dense<0.000000e+00> : vector<2x96xf32>
    %106 = tpu.matmul %98, %16, %cst_40 {dimension_numbers = #tpu.dot_dimension_numbers<[1], [0], [0], [1], [0, 0, 1, 1], [], []>} : vector<2x32xf32>, vector<32x96xf32>, vector<2x96xf32> -> vector<2x96xf32>
    %107 = vector.extract_strided_slice %105 {offsets = [0, 0], sizes = [2, 64], strides = [1, 1]} : vector<2x96xf32> to vector<2x64xf32>
    %108 = vector.extract_strided_slice %106 {offsets = [0, 0], sizes = [2, 64], strides = [1, 1]} : vector<2x96xf32> to vector<2x64xf32>
    %109 = arith.addf %107, %108 : vector<2x64xf32>
    %110 = arith.negf %109 : vector<2x64xf32>
    %111 = math.exp %110 : vector<2x64xf32>
    %cst_41 = arith.constant 1.000000e+00 : f32
    %112 = vector.broadcast %cst_41 : f32 to vector<2x64xf32>
    %113 = arith.addf %112, %111 : vector<2x64xf32>
    %114 = arith.divf %112, %113 : vector<2x64xf32>
    %115 = vector.extract_strided_slice %114 {offsets = [0, 0], sizes = [2, 32], strides = [1, 1]} : vector<2x64xf32> to vector<2x32xf32>
    %116 = vector.extract_strided_slice %114 {offsets = [0, 32], sizes = [2, 32], strides = [1, 1]} : vector<2x64xf32> to vector<2x32xf32>
    %117 = vector.extract_strided_slice %105 {offsets = [0, 64], sizes = [2, 32], strides = [1, 1]} : vector<2x96xf32> to vector<2x32xf32>
    %118 = vector.extract_strided_slice %106 {offsets = [0, 64], sizes = [2, 32], strides = [1, 1]} : vector<2x96xf32> to vector<2x32xf32>
    %119 = vector.broadcast %17 : vector<1x32xf32> to vector<2x32xf32>
    %120 = arith.addf %118, %119 : vector<2x32xf32>
    %121 = arith.mulf %115, %120 : vector<2x32xf32>
    %122 = arith.addf %117, %121 : vector<2x32xf32>
    %123 = math.tanh %122 : vector<2x32xf32>
    %124 = arith.subf %98, %123 : vector<2x32xf32>
    %125 = arith.mulf %116, %124 : vector<2x32xf32>
    %126 = arith.addf %123, %125 : vector<2x32xf32>
    %127 = arith.index_cast %c3_i32 : i32 to index
    %c0_42 = arith.constant 0 : index
    %c0_43 = arith.constant 0 : index
    %128 = vector.load %arg9[%127, %c0_42, %c0_43] : memref<8x2x32xf32, #tpu.memory_space<vmem>>, vector<1x2x32xf32>
    %129 = vector.shape_cast %128 : vector<1x2x32xf32> to vector<2x32xf32>
    %130 = vector.shape_cast %126 : vector<2x32xf32> to vector<1x2x32xf32>
    tpu.vector_store %arg9[%127, %c0_42, %c0_43], %130 {strides = array<i32>} : memref<8x2x32xf32, #tpu.memory_space<vmem>>, vector<1x2x32xf32>,
    %c4_i32 = arith.constant 4 : i32
    %131 = arith.index_cast %c4_i32 : i32 to index
    %c0_44 = arith.constant 0 : index
    %c0_45 = arith.constant 0 : index
    %132 = vector.load %arg8[%131, %c0_44, %c0_45] : memref<8x2x96xf32, #tpu.memory_space<vmem>>, vector<1x2x96xf32>
    %133 = vector.shape_cast %132 : vector<1x2x96xf32> to vector<2x96xf32>
    %cst_46 = arith.constant dense<0.000000e+00> : vector<2x96xf32>
    %134 = tpu.matmul %126, %16, %cst_46 {dimension_numbers = #tpu.dot_dimension_numbers<[1], [0], [0], [1], [0, 0, 1, 1], [], []>} : vector<2x32xf32>, vector<32x96xf32>, vector<2x96xf32> -> vector<2x96xf32>
    %135 = vector.extract_strided_slice %133 {offsets = [0, 0], sizes = [2, 64], strides = [1, 1]} : vector<2x96xf32> to vector<2x64xf32>
    %136 = vector.extract_strided_slice %134 {offsets = [0, 0], sizes = [2, 64], strides = [1, 1]} : vector<2x96xf32> to vector<2x64xf32>
    %137 = arith.addf %135, %136 : vector<2x64xf32>
    %138 = arith.negf %137 : vector<2x64xf32>
    %139 = math.exp %138 : vector<2x64xf32>
    %cst_47 = arith.constant 1.000000e+00 : f32
    %140 = vector.broadcast %cst_47 : f32 to vector<2x64xf32>
    %141 = arith.addf %140, %139 : vector<2x64xf32>
    %142 = arith.divf %140, %141 : vector<2x64xf32>
    %143 = vector.extract_strided_slice %142 {offsets = [0, 0], sizes = [2, 32], strides = [1, 1]} : vector<2x64xf32> to vector<2x32xf32>
    %144 = vector.extract_strided_slice %142 {offsets = [0, 32], sizes = [2, 32], strides = [1, 1]} : vector<2x64xf32> to vector<2x32xf32>
    %145 = vector.extract_strided_slice %133 {offsets = [0, 64], sizes = [2, 32], strides = [1, 1]} : vector<2x96xf32> to vector<2x32xf32>
    %146 = vector.extract_strided_slice %134 {offsets = [0, 64], sizes = [2, 32], strides = [1, 1]} : vector<2x96xf32> to vector<2x32xf32>
    %147 = vector.broadcast %17 : vector<1x32xf32> to vector<2x32xf32>
    %148 = arith.addf %146, %147 : vector<2x32xf32>
    %149 = arith.mulf %143, %148 : vector<2x32xf32>
    %150 = arith.addf %145, %149 : vector<2x32xf32>
    %151 = math.tanh %150 : vector<2x32xf32>
    %152 = arith.subf %126, %151 : vector<2x32xf32>
    %153 = arith.mulf %144, %152 : vector<2x32xf32>
    %154 = arith.addf %151, %153 : vector<2x32xf32>
    %155 = arith.index_cast %c4_i32 : i32 to index
    %c0_48 = arith.constant 0 : index
    %c0_49 = arith.constant 0 : index
    %156 = vector.load %arg9[%155, %c0_48, %c0_49] : memref<8x2x32xf32, #tpu.memory_space<vmem>>, vector<1x2x32xf32>
    %157 = vector.shape_cast %156 : vector<1x2x32xf32> to vector<2x32xf32>
    %158 = vector.shape_cast %154 : vector<2x32xf32> to vector<1x2x32xf32>
    tpu.vector_store %arg9[%155, %c0_48, %c0_49], %158 {strides = array<i32>} : memref<8x2x32xf32, #tpu.memory_space<vmem>>, vector<1x2x32xf32>,
    %c5_i32 = arith.constant 5 : i32
    %159 = arith.index_cast %c5_i32 : i32 to index
    %c0_50 = arith.constant 0 : index
    %c0_51 = arith.constant 0 : index
    %160 = vector.load %arg8[%159, %c0_50, %c0_51] : memref<8x2x96xf32, #tpu.memory_space<vmem>>, vector<1x2x96xf32>
    %161 = vector.shape_cast %160 : vector<1x2x96xf32> to vector<2x96xf32>
    %cst_52 = arith.constant dense<0.000000e+00> : vector<2x96xf32>
    %162 = tpu.matmul %154, %16, %cst_52 {dimension_numbers = #tpu.dot_dimension_numbers<[1], [0], [0], [1], [0, 0, 1, 1], [], []>} : vector<2x32xf32>, vector<32x96xf32>, vector<2x96xf32> -> vector<2x96xf32>
    %163 = vector.extract_strided_slice %161 {offsets = [0, 0], sizes = [2, 64], strides = [1, 1]} : vector<2x96xf32> to vector<2x64xf32>
    %164 = vector.extract_strided_slice %162 {offsets = [0, 0], sizes = [2, 64], strides = [1, 1]} : vector<2x96xf32> to vector<2x64xf32>
    %165 = arith.addf %163, %164 : vector<2x64xf32>
    %166 = arith.negf %165 : vector<2x64xf32>
    %167 = math.exp %166 : vector<2x64xf32>
    %cst_53 = arith.constant 1.000000e+00 : f32
    %168 = vector.broadcast %cst_53 : f32 to vector<2x64xf32>
    %169 = arith.addf %168, %167 : vector<2x64xf32>
    %170 = arith.divf %168, %169 : vector<2x64xf32>
    %171 = vector.extract_strided_slice %170 {offsets = [0, 0], sizes = [2, 32], strides = [1, 1]} : vector<2x64xf32> to vector<2x32xf32>
    %172 = vector.extract_strided_slice %170 {offsets = [0, 32], sizes = [2, 32], strides = [1, 1]} : vector<2x64xf32> to vector<2x32xf32>
    %173 = vector.extract_strided_slice %161 {offsets = [0, 64], sizes = [2, 32], strides = [1, 1]} : vector<2x96xf32> to vector<2x32xf32>
    %174 = vector.extract_strided_slice %162 {offsets = [0, 64], sizes = [2, 32], strides = [1, 1]} : vector<2x96xf32> to vector<2x32xf32>
    %175 = vector.broadcast %17 : vector<1x32xf32> to vector<2x32xf32>
    %176 = arith.addf %174, %175 : vector<2x32xf32>
    %177 = arith.mulf %171, %176 : vector<2x32xf32>
    %178 = arith.addf %173, %177 : vector<2x32xf32>
    %179 = math.tanh %178 : vector<2x32xf32>
    %180 = arith.subf %154, %179 : vector<2x32xf32>
    %181 = arith.mulf %172, %180 : vector<2x32xf32>
    %182 = arith.addf %179, %181 : vector<2x32xf32>
    %183 = arith.index_cast %c5_i32 : i32 to index
    %c0_54 = arith.constant 0 : index
    %c0_55 = arith.constant 0 : index
    %184 = vector.load %arg9[%183, %c0_54, %c0_55] : memref<8x2x32xf32, #tpu.memory_space<vmem>>, vector<1x2x32xf32>
    %185 = vector.shape_cast %184 : vector<1x2x32xf32> to vector<2x32xf32>
    %186 = vector.shape_cast %182 : vector<2x32xf32> to vector<1x2x32xf32>
    tpu.vector_store %arg9[%183, %c0_54, %c0_55], %186 {strides = array<i32>} : memref<8x2x32xf32, #tpu.memory_space<vmem>>, vector<1x2x32xf32>,
    %c6_i32 = arith.constant 6 : i32
    %187 = arith.index_cast %c6_i32 : i32 to index
    %c0_56 = arith.constant 0 : index
    %c0_57 = arith.constant 0 : index
    %188 = vector.load %arg8[%187, %c0_56, %c0_57] : memref<8x2x96xf32, #tpu.memory_space<vmem>>, vector<1x2x96xf32>
    %189 = vector.shape_cast %188 : vector<1x2x96xf32> to vector<2x96xf32>
    %cst_58 = arith.constant dense<0.000000e+00> : vector<2x96xf32>
    %190 = tpu.matmul %182, %16, %cst_58 {dimension_numbers = #tpu.dot_dimension_numbers<[1], [0], [0], [1], [0, 0, 1, 1], [], []>} : vector<2x32xf32>, vector<32x96xf32>, vector<2x96xf32> -> vector<2x96xf32>
    %191 = vector.extract_strided_slice %189 {offsets = [0, 0], sizes = [2, 64], strides = [1, 1]} : vector<2x96xf32> to vector<2x64xf32>
    %192 = vector.extract_strided_slice %190 {offsets = [0, 0], sizes = [2, 64], strides = [1, 1]} : vector<2x96xf32> to vector<2x64xf32>
    %193 = arith.addf %191, %192 : vector<2x64xf32>
    %194 = arith.negf %193 : vector<2x64xf32>
    %195 = math.exp %194 : vector<2x64xf32>
    %cst_59 = arith.constant 1.000000e+00 : f32
    %196 = vector.broadcast %cst_59 : f32 to vector<2x64xf32>
    %197 = arith.addf %196, %195 : vector<2x64xf32>
    %198 = arith.divf %196, %197 : vector<2x64xf32>
    %199 = vector.extract_strided_slice %198 {offsets = [0, 0], sizes = [2, 32], strides = [1, 1]} : vector<2x64xf32> to vector<2x32xf32>
    %200 = vector.extract_strided_slice %198 {offsets = [0, 32], sizes = [2, 32], strides = [1, 1]} : vector<2x64xf32> to vector<2x32xf32>
    %201 = vector.extract_strided_slice %189 {offsets = [0, 64], sizes = [2, 32], strides = [1, 1]} : vector<2x96xf32> to vector<2x32xf32>
    %202 = vector.extract_strided_slice %190 {offsets = [0, 64], sizes = [2, 32], strides = [1, 1]} : vector<2x96xf32> to vector<2x32xf32>
    %203 = vector.broadcast %17 : vector<1x32xf32> to vector<2x32xf32>
    %204 = arith.addf %202, %203 : vector<2x32xf32>
    %205 = arith.mulf %199, %204 : vector<2x32xf32>
    %206 = arith.addf %201, %205 : vector<2x32xf32>
    %207 = math.tanh %206 : vector<2x32xf32>
    %208 = arith.subf %182, %207 : vector<2x32xf32>
    %209 = arith.mulf %200, %208 : vector<2x32xf32>
    %210 = arith.addf %207, %209 : vector<2x32xf32>
    %211 = arith.index_cast %c6_i32 : i32 to index
    %c0_60 = arith.constant 0 : index
    %c0_61 = arith.constant 0 : index
    %212 = vector.load %arg9[%211, %c0_60, %c0_61] : memref<8x2x32xf32, #tpu.memory_space<vmem>>, vector<1x2x32xf32>
    %213 = vector.shape_cast %212 : vector<1x2x32xf32> to vector<2x32xf32>
    %214 = vector.shape_cast %210 : vector<2x32xf32> to vector<1x2x32xf32>
    tpu.vector_store %arg9[%211, %c0_60, %c0_61], %214 {strides = array<i32>} : memref<8x2x32xf32, #tpu.memory_space<vmem>>, vector<1x2x32xf32>,
    %c7_i32 = arith.constant 7 : i32
    %215 = arith.index_cast %c7_i32 : i32 to index
    %c0_62 = arith.constant 0 : index
    %c0_63 = arith.constant 0 : index
    %216 = vector.load %arg8[%215, %c0_62, %c0_63] : memref<8x2x96xf32, #tpu.memory_space<vmem>>, vector<1x2x96xf32>
    %217 = vector.shape_cast %216 : vector<1x2x96xf32> to vector<2x96xf32>
    %cst_64 = arith.constant dense<0.000000e+00> : vector<2x96xf32>
    %218 = tpu.matmul %210, %16, %cst_64 {dimension_numbers = #tpu.dot_dimension_numbers<[1], [0], [0], [1], [0, 0, 1, 1], [], []>} : vector<2x32xf32>, vector<32x96xf32>, vector<2x96xf32> -> vector<2x96xf32>
    %219 = vector.extract_strided_slice %217 {offsets = [0, 0], sizes = [2, 64], strides = [1, 1]} : vector<2x96xf32> to vector<2x64xf32>
    %220 = vector.extract_strided_slice %218 {offsets = [0, 0], sizes = [2, 64], strides = [1, 1]} : vector<2x96xf32> to vector<2x64xf32>
    %221 = arith.addf %219, %220 : vector<2x64xf32>
    %222 = arith.negf %221 : vector<2x64xf32>
    %223 = math.exp %222 : vector<2x64xf32>
    %cst_65 = arith.constant 1.000000e+00 : f32
    %224 = vector.broadcast %cst_65 : f32 to vector<2x64xf32>
    %225 = arith.addf %224, %223 : vector<2x64xf32>
    %226 = arith.divf %224, %225 : vector<2x64xf32>
    %227 = vector.extract_strided_slice %226 {offsets = [0, 0], sizes = [2, 32], strides = [1, 1]} : vector<2x64xf32> to vector<2x32xf32>
    %228 = vector.extract_strided_slice %226 {offsets = [0, 32], sizes = [2, 32], strides = [1, 1]} : vector<2x64xf32> to vector<2x32xf32>
    %229 = vector.extract_strided_slice %217 {offsets = [0, 64], sizes = [2, 32], strides = [1, 1]} : vector<2x96xf32> to vector<2x32xf32>
    %230 = vector.extract_strided_slice %218 {offsets = [0, 64], sizes = [2, 32], strides = [1, 1]} : vector<2x96xf32> to vector<2x32xf32>
    %231 = vector.broadcast %17 : vector<1x32xf32> to vector<2x32xf32>
    %232 = arith.addf %230, %231 : vector<2x32xf32>
    %233 = arith.mulf %227, %232 : vector<2x32xf32>
    %234 = arith.addf %229, %233 : vector<2x32xf32>
    %235 = math.tanh %234 : vector<2x32xf32>
    %236 = arith.subf %210, %235 : vector<2x32xf32>
    %237 = arith.mulf %228, %236 : vector<2x32xf32>
    %238 = arith.addf %235, %237 : vector<2x32xf32>
    %239 = arith.index_cast %c7_i32 : i32 to index
    %c0_66 = arith.constant 0 : index
    %c0_67 = arith.constant 0 : index
    %240 = vector.load %arg9[%239, %c0_66, %c0_67] : memref<8x2x32xf32, #tpu.memory_space<vmem>>, vector<1x2x32xf32>
    %241 = vector.shape_cast %240 : vector<1x2x32xf32> to vector<2x32xf32>
    %242 = vector.shape_cast %238 : vector<2x32xf32> to vector<1x2x32xf32>
    tpu.vector_store %arg9[%239, %c0_66, %c0_67], %242 {strides = array<i32>} : memref<8x2x32xf32, #tpu.memory_space<vmem>>, vector<1x2x32xf32>,
    %c8_i32 = arith.constant 8 : i32
    %c0_68 = arith.constant 0 : index
    %c0_69 = arith.constant 0 : index
    %c0_70 = arith.constant 0 : index
    %243 = vector.load %arg9[%c0_68, %c0_69, %c0_70] : memref<8x2x32xf32, #tpu.memory_space<vmem>>, vector<8x2x32xf32>
    %c0_71 = arith.constant 0 : index
    %c0_72 = arith.constant 0 : index
    %244 = vector.load %arg5[%c0_71, %c0_72] : memref<32x12xf32, #tpu.memory_space<vmem>>, vector<32x12xf32>
    %c0_73 = arith.constant 0 : index
    %c0_74 = arith.constant 0 : index
    %245 = vector.load %arg6[%c0_73, %c0_74] : memref<1x12xf32, #tpu.memory_space<vmem>>, vector<1x12xf32>
    %246 = vector.extract_strided_slice %243 {offsets = [0, 0, 0], sizes = [8, 1, 32], strides = [1, 1, 1]} : vector<8x2x32xf32> to vector<8x1x32xf32>
    %247 = vector.shape_cast %246 : vector<8x1x32xf32> to vector<8x32xf32>
    %cst_75 = arith.constant dense<0.000000e+00> : vector<8x12xf32>
    %248 = tpu.matmul %247, %244, %cst_75 {dimension_numbers = #tpu.dot_dimension_numbers<[1], [0], [0], [1], [0, 0, 1, 1], [], []>} : vector<8x32xf32>, vector<32x12xf32>, vector<8x12xf32> -> vector<8x12xf32>
    %249 = vector.broadcast %245 : vector<1x12xf32> to vector<8x12xf32>
    %250 = arith.addf %248, %249 : vector<8x12xf32>
    %c0_76 = arith.constant 0 : index
    %c0_77 = arith.constant 0 : index
    %c0_78 = arith.constant 0 : index
    %251 = vector.load %arg7[%c0_76, %c0_77, %c0_78] : memref<2x8x12xf32, #tpu.memory_space<vmem>>, vector<1x8x12xf32>
    %252 = vector.shape_cast %251 : vector<1x8x12xf32> to vector<8x12xf32>
    %253 = vector.shape_cast %250 : vector<8x12xf32> to vector<1x8x12xf32>
    tpu.vector_store %arg7[%c0_76, %c0_77, %c0_78], %253 {strides = array<i32>} : memref<2x8x12xf32, #tpu.memory_space<vmem>>, vector<1x8x12xf32>,
    %254 = vector.extract_strided_slice %243 {offsets = [0, 1, 0], sizes = [8, 1, 32], strides = [1, 1, 1]} : vector<8x2x32xf32> to vector<8x1x32xf32>
    %255 = vector.shape_cast %254 : vector<8x1x32xf32> to vector<8x32xf32>
    %cst_79 = arith.constant dense<0.000000e+00> : vector<8x12xf32>
    %256 = tpu.matmul %255, %244, %cst_79 {dimension_numbers = #tpu.dot_dimension_numbers<[1], [0], [0], [1], [0, 0, 1, 1], [], []>} : vector<8x32xf32>, vector<32x12xf32>, vector<8x12xf32> -> vector<8x12xf32>
    %257 = vector.broadcast %245 : vector<1x12xf32> to vector<8x12xf32>
    %258 = arith.addf %256, %257 : vector<8x12xf32>
    %c1_80 = arith.constant 1 : index
    %c0_81 = arith.constant 0 : index
    %c0_82 = arith.constant 0 : index
    %259 = vector.load %arg7[%c1_80, %c0_81, %c0_82] : memref<2x8x12xf32, #tpu.memory_space<vmem>>, vector<1x8x12xf32>
    %260 = vector.shape_cast %259 : vector<1x8x12xf32> to vector<8x12xf32>
    %261 = vector.shape_cast %258 : vector<8x12xf32> to vector<1x8x12xf32>
    tpu.vector_store %arg7[%c1_80, %c0_81, %c0_82], %261 {strides = array<i32>} : memref<2x8x12xf32, #tpu.memory_space<vmem>>, vector<1x8x12xf32>,
    return
  }
}

</mosaic_0001>

<llo_original>
// kernel: decoder_legacy_forward.1
$region0: #{decoder_legacy_forward.1}
  #allocation0 [shape = 'u32[]', space=smem, size = 0x4, offset = 0x4, fixed_abs, tag = 'smem constant byte address 0x4 - core index']
  #allocation1 [shape = 'u32[144,128]{1,0:T(1,128)}', space=vmem, size = 0x12000, scoped, tag = 'internal scratch']
  #allocation2 [shape = 'f32[8,2,96]{2,1,0:T(2,128)}', space=vmem, size = 0x2000, scoped, tag = 'scratch operand']
  #allocation3 [shape = 'f32[8,2,32]{2,1,0:T(2,128)}', space=vmem, size = 0x2000, scoped, tag = 'scratch operand']
  %s0 = inlined_call_operand.vmem [shape: f32[2,8,4], index: 0, kind: input, shape index: {}]
  %s1 = inlined_call_operand.vmem [shape: f32[4,96], index: 1, kind: input, shape index: {}]
  %s2 = inlined_call_operand.vmem [shape: f32[32,96], index: 2, kind: input, shape index: {}]
  %s3 = inlined_call_operand.vmem [shape: f32[1,96], index: 3, kind: input, shape index: {}]
  %s4 = inlined_call_operand.vmem [shape: f32[1,32], index: 4, kind: input, shape index: {}]
  %s5 = inlined_call_operand.vmem [shape: f32[32,12], index: 5, kind: input, shape index: {}]
  %s6 = inlined_call_operand.vmem [shape: f32[1,12], index: 6, kind: input, shape index: {}]
  %s7 = inlined_call_operand.hbm [shape: f32[2,8,12], index: 7, kind: output, shape index: {}]
  %s8 = sld [smem:[#allocation0]]
  $region38: #{decoder_legacy_forward.1} parent=0
    _
  %s10 = ssub.s32 1, %s8
  %s11 = scalar_select 0, %s10, %s8
  $region1: #{decoder_legacy_forward.1} parent=0
    #allocation4 [shape = 'u8[8192]{0}', space=vmem, size = 0x2000, scoped, tag = 'output window, operand 0, single buffered']
    #allocation5 [shape = 's32[1]{0}', space=sflag, size = 0x4, scoped, tag = 'scoped memory for decoder_legacy_forward.1']
    %12 = vsyncpa [#allocation5], 0
    // Predicated region
    $region2: #{decoder_legacy_forward.1} parent=1 // pred_check
      _
    $region3: #{decoder_legacy_forward.1} parent=1 // pred_check_branch
      %14 = sbr.rel (0) target = $region5
    $region4: #{decoder_legacy_forward.1} parent=1 // pred_region
      _
    $region5: #{decoder_legacy_forward.1} parent=1 // pred_fallthru
      _
    // Predicated region
    $region6: #{decoder_legacy_forward.1} parent=1 // pred_check
      _
    $region7: #{decoder_legacy_forward.1} parent=1 // pred_check_branch
      %16 = sbr.rel (0) target = $region9
    $region8: #{decoder_legacy_forward.1} parent=1 // pred_region
      _
    $region9: #{decoder_legacy_forward.1} parent=1 // pred_fallthru
      _
    // Predicated region
    $region10: #{decoder_legacy_forward.1} parent=1 // pred_check
      _
    $region11: #{decoder_legacy_forward.1} parent=1 // pred_check_branch
      %18 = sbr.rel (0) target = $region13
    $region12: #{decoder_legacy_forward.1} parent=1 // pred_region
      _
    $region13: #{decoder_legacy_forward.1} parent=1 // pred_fallthru
      _
    // Predicated region
    $region14: #{decoder_legacy_forward.1} parent=1 // pred_check
      _
    $region15: #{decoder_legacy_forward.1} parent=1 // pred_check_branch
      %20 = sbr.rel (0) target = $region17
    $region16: #{decoder_legacy_forward.1} parent=1 // pred_region
      _
    $region17: #{decoder_legacy_forward.1} parent=1 // pred_fallthru
      _
    // Predicated region
    $region18: #{decoder_legacy_forward.1} parent=1 // pred_check
      _
    $region19: #{decoder_legacy_forward.1} parent=1 // pred_check_branch
      %22 = sbr.rel (0) target = $region21
    $region20: #{decoder_legacy_forward.1} parent=1 // pred_region
      _
    $region21: #{decoder_legacy_forward.1} parent=1 // pred_fallthru
      _
    // Predicated region
    $region22: #{decoder_legacy_forward.1} parent=1 // pred_check
      _
    $region23: #{decoder_legacy_forward.1} parent=1 // pred_check_branch
      %24 = sbr.rel (0) target = $region25
    $region24: #{decoder_legacy_forward.1} parent=1 // pred_region
      _
    $region25: #{decoder_legacy_forward.1} parent=1 // pred_fallthru
      _
    // Predicated region
    $region26: #{decoder_legacy_forward.1} parent=1 // pred_check
      _
    $region27: #{decoder_legacy_forward.1} parent=1 // pred_check_branch
      %26 = sbr.rel (0) target = $region29
    $region28: #{decoder_legacy_forward.1} parent=1 // pred_region
      _
    $region29: #{decoder_legacy_forward.1} parent=1 // pred_fallthru
      _
    %v27 = vld [vmem:[%s1] sm:$0xf]
    %v28 = vld [vmem:[%s3] sm:$0x1]
    %v29 = vld [vmem:[%s0] sm:$0xff]
    %v31 = vlaneseq
    %v32 = vshrl.u32 %v31, 7
    %v33 = vsub.s32 0, %v32
    %v34 = vrot.slane %v28, %v33
    %vm36 = vcmask 31744
    %v38 = vsel %vm36, %v29, 0
    %vm40 = vcmask 1043456
    %v42 = vsel %vm40, %v27, 0
    %44 = vmatprep.subr.mxu0 0.0
    %45 = vmatpush1.msra.mxu0 %v42
    %46 = vmatprep.subr.mxu0 0.0
    %47 = vmatpush1.msra.mxu0 0.0
    %48 = vmatprep.subr.mxu0 0.0
    %49 = vmatpush1.msra.mxu0 0.0
    %50 = vmatprep.subr.mxu0 0.0
    %51 = vmatpush1.msra.mxu0 0.0
    %52 = vmatprep.subr.mxu0 0.0
    %53 = vmatpush1.msra.mxu0 0.0
    %54 = vmatprep.subr.mxu0 0.0
    %55 = vmatpush1.msra.mxu0 0.0
    %56 = vmatprep.subr.mxu0 0.0
    %57 = vmatpush1.msra.mxu0 0.0
    %58 = vmatprep.subr.mxu0 0.0
    %59 = vmatpush1.msra.mxu0 0.0
    %60 = vmatprep.subr.mxu0 0.0
    %61 = vmatpush1.msra.mxu0 0.0
    %62 = vmatprep.subr.mxu0 0.0
    %63 = vmatpush1.msra.mxu0 0.0
    %64 = vmatprep.subr.mxu0 0.0
    %65 = vmatpush1.msra.mxu0 0.0
    %66 = vmatprep.subr.mxu0 0.0
    %67 = vmatpush1.msra.mxu0 0.0
    %68 = vmatprep.subr.mxu0 0.0
    %69 = vmatpush1.msra.mxu0 0.0
    %70 = vmatprep.subr.mxu0 0.0
    %71 = vmatpush1.msra.mxu0 0.0
    %72 = vmatprep.subr.mxu0 0.0
    %73 = vmatpush1.msra.mxu0 0.0
    %74 = vmatprep.subr.mxu0 0.0
    %75 = vmatpush1.msra.mxu0 0.0
    %76 = vmatprep.subr.mxu0 0.0
    %77 = vmatpush1.msra.mxu0 0.0
    %78 = vmatprep.subr.mxu0 0.0
    %79 = vmatpush1.msra.mxu0 0.0
    %80 = vmatprep.subr.mxu0 0.0
    %81 = vmatpush1.msra.mxu0 0.0
    %82 = vmatprep.subr.mxu0 0.0
    %83 = vmatpush1.msra.mxu0 0.0
    %84 = vmatprep.subr.mxu0 0.0
    %85 = vmatpush1.msra.mxu0 0.0
    %86 = vmatprep.subr.mxu0 0.0
    %87 = vmatpush1.msra.mxu0 0.0
    %88 = vmatprep.subr.mxu0 0.0
    %89 = vmatpush1.msra.mxu0 0.0
    %90 = vmatprep.subr.mxu0 0.0
    %91 = vmatpush1.msra.mxu0 0.0
    %92 = vmatprep.subr.mxu0 0.0
    %93 = vmatpush1.msra.mxu0 0.0
    %94 = vmatprep.subr.mxu0 0.0
    %95 = vmatpush1.msra.mxu0 0.0
    %96 = vmatprep.subr.mxu0 0.0
    %97 = vmatpush1.msra.mxu0 0.0
    %98 = vmatprep.subr.mxu0 0.0
    %99 = vmatpush1.msra.mxu0 0.0
    %100 = vmatprep.subr.mxu0 0.0
    %101 = vmatpush1.msra.mxu0 0.0
    %102 = vmatprep.subr.mxu0 0.0
    %103 = vmatpush1.msra.mxu0 0.0
    %104 = vmatprep.subr.mxu0 0.0
    %105 = vmatpush1.msra.mxu0 0.0
    %106 = vmatprep.subr.mxu0 0.0
    %107 = vmatpush1.msra.mxu0 0.0
    %108 = vmatprep.mubr.f32.mxu0 0.0
    %109 = vmatmul.mubr.f32.gmra.mrb[0].mxu0 %v38
    %v110 = vpop.f32.mrb[0].mxu0
    %v111 = vadd.f32 %v34, %v110
    %v112 = vpop.f32.mrb[0].mxu0
    %113 = vdwg.mxu0
    %v115 = vcombine.high %v111, %v111
    %v117 = vunpack.c.l.s4 1966171168
    %v118 = vunpack.c.0.s8 %v117
    %v119 = vlaneseq
    %v120 = vshrl.u32 %v119, 7
    %v121 = vsub.s32 %v118, %v120
    %v122 = vrot.slane %v111, %v121
    %v124 = vunpack.c.l.s4 1966171168
    %v125 = vunpack.c.0.s8 %v124
    %v126 = vlaneseq
    %v127 = vshrl.u32 %v126, 7
    %v128 = vsub.s32 %v125, %v127
    %v129 = vrot.slane %v115, %v128
    %v130 = vcombine.high %v122, %v122
    %v131 = vcombine.high %v129, %v129
    %v133 = vunpack.c.l.s4 1966171168
    %v134 = vunpack.c.0.s8 %v133
    %v135 = vlaneseq
    %v136 = vshrl.u32 %v135, 7
    %v137 = vsub.s32 %v134, %v136
    %v138 = vrot.slane %v122, %v137
    %v140 = vunpack.c.l.s4 1966171168
    %v141 = vunpack.c.0.s8 %v140
    %v142 = vlaneseq
    %v143 = vshrl.u32 %v142, 7
    %v144 = vsub.s32 %v141, %v143
    %v145 = vrot.slane %v129, %v144
    %v147 = vunpack.c.l.s4 1966171168
    %v148 = vunpack.c.0.s8 %v147
    %v149 = vlaneseq
    %v150 = vshrl.u32 %v149, 7
    %v151 = vsub.s32 %v148, %v150
    %v152 = vrot.slane %v130, %v151
    %v154 = vunpack.c.l.s4 1966171168
    %v155 = vunpack.c.0.s8 %v154
    %v156 = vlaneseq
    %v157 = vshrl.u32 %v156, 7
    %v158 = vsub.s32 %v155, %v157
    %v159 = vrot.slane %v131, %v158
    %v160 = vcombine.high %v138, %v138
    %v161 = vcombine.high %v145, %v145
    %v162 = vcombine.high %v152, %v152
    %v163 = vcombine.high %v159, %v159
    %vm172 = vcmask 778240
    %173 = vst.msk [vmem:[#allocation2] sm:$0x1] %vm172, %v138
    %174 = vst.msk [vmem:[#allocation2 + $0x2] sm:$0x1] %vm172, %v152
    %175 = vst.msk [vmem:[#allocation2 + $0x4] sm:$0x1] %vm172, %v160
    %176 = vst.msk [vmem:[#allocation2 + $0x6] sm:$0x1] %vm172, %v162
    %177 = vst.msk [vmem:[#allocation2 + $0x8] sm:$0x1] %vm172, %v145
    %178 = vst.msk [vmem:[#allocation2 + $0xa] sm:$0x1] %vm172, %v159
    %179 = vst.msk [vmem:[#allocation2 + $0xc] sm:$0x1] %vm172, %v161
    %180 = vst.msk [vmem:[#allocation2 + $0xe] sm:$0x1] %vm172, %v163
    %s181 = scalar_lea.vmem %s0, 8
    %v182 = vld [vmem:[%s181] sm:$0xff]
    %v184 = vsel %vm36, %v182, 0
    %186 = vmatprep.subr.mxu0 0.0
    %187 = vmatpush1.msra.mxu0 %v42
    %188 = vmatprep.subr.mxu0 0.0
    %189 = vmatpush1.msra.mxu0 0.0
    %190 = vmatprep.subr.mxu0 0.0
    %191 = vmatpush1.msra.mxu0 0.0
    %192 = vmatprep.subr.mxu0 0.0
    %193 = vmatpush1.msra.mxu0 0.0
    %194 = vmatprep.subr.mxu0 0.0
    %195 = vmatpush1.msra.mxu0 0.0
    %196 = vmatprep.subr.mxu0 0.0
    %197 = vmatpush1.msra.mxu0 0.0
    %198 = vmatprep.subr.mxu0 0.0
    %199 = vmatpush1.msra.mxu0 0.0
    %200 = vmatprep.subr.mxu0 0.0
    %201 = vmatpush1.msra.mxu0 0.0
    %202 = vmatprep.subr.mxu0 0.0
    %203 = vmatpush1.msra.mxu0 0.0
    %204 = vmatprep.subr.mxu0 0.0
    %205 = vmatpush1.msra.mxu0 0.0
    %206 = vmatprep.subr.mxu0 0.0
    %207 = vmatpush1.msra.mxu0 0.0
    %208 = vmatprep.subr.mxu0 0.0
    %209 = vmatpush1.msra.mxu0 0.0
    %210 = vmatprep.subr.mxu0 0.0
    %211 = vmatpush1.msra.mxu0 0.0
    %212 = vmatprep.subr.mxu0 0.0
    %213 = vmatpush1.msra.mxu0 0.0
    %214 = vmatprep.subr.mxu0 0.0
    %215 = vmatpush1.msra.mxu0 0.0
    %216 = vmatprep.subr.mxu0 0.0
    %217 = vmatpush1.msra.mxu0 0.0
    %218 = vmatprep.subr.mxu0 0.0
    %219 = vmatpush1.msra.mxu0 0.0
    %220 = vmatprep.subr.mxu0 0.0
    %221 = vmatpush1.msra.mxu0 0.0
    %222 = vmatprep.subr.mxu0 0.0
    %223 = vmatpush1.msra.mxu0 0.0
    %224 = vmatprep.subr.mxu0 0.0
    %225 = vmatpush1.msra.mxu0 0.0
    %226 = vmatprep.subr.mxu0 0.0
    %227 = vmatpush1.msra.mxu0 0.0
    %228 = vmatprep.subr.mxu0 0.0
    %229 = vmatpush1.msra.mxu0 0.0
    %230 = vmatprep.subr.mxu0 0.0
    %231 = vmatpush1.msra.mxu0 0.0
    %232 = vmatprep.subr.mxu0 0.0
    %233 = vmatpush1.msra.mxu0 0.0
    %234 = vmatprep.subr.mxu0 0.0
    %235 = vmatpush1.msra.mxu0 0.0
    %236 = vmatprep.subr.mxu0 0.0
    %237 = vmatpush1.msra.mxu0 0.0
    %238 = vmatprep.subr.mxu0 0.0
    %239 = vmatpush1.msra.mxu0 0.0
    %240 = vmatprep.subr.mxu0 0.0
    %241 = vmatpush1.msra.mxu0 0.0
    %242 = vmatprep.subr.mxu0 0.0
    %243 = vmatpush1.msra.mxu0 0.0
    %244 = vmatprep.subr.mxu0 0.0
    %245 = vmatpush1.msra.mxu0 0.0
    %246 = vmatprep.subr.mxu0 0.0
    %247 = vmatpush1.msra.mxu0 0.0
    %248 = vmatprep.subr.mxu0 0.0
    %249 = vmatpush1.msra.mxu0 0.0
    %250 = vmatprep.mubr.f32.mxu0 0.0
    %251 = vmatmul.mubr.f32.gmra.mrb[0].mxu0 %v184
    %v252 = vpop.f32.mrb[0].mxu0
    %v253 = vadd.f32 %v34, %v252
    %v254 = vpop.f32.mrb[0].mxu0
    %255 = vdwg.mxu0
    %v257 = vcombine.high %v253, %v253
    %v259 = vunpack.c.l.s4 1966171168
    %v260 = vunpack.c.0.s8 %v259
    %v261 = vlaneseq
    %v262 = vshrl.u32 %v261, 7
    %v263 = vsub.s32 %v260, %v262
    %v264 = vrot.slane %v253, %v263
    %v266 = vunpack.c.l.s4 1966171168
    %v267 = vunpack.c.0.s8 %v266
    %v268 = vlaneseq
    %v269 = vshrl.u32 %v268, 7
    %v270 = vsub.s32 %v267, %v269
    %v271 = vrot.slane %v257, %v270
    %v272 = vcombine.high %v264, %v264
    %v273 = vcombine.high %v271, %v271
    %v275 = vunpack.c.l.s4 1966171168
    %v276 = vunpack.c.0.s8 %v275
    %v277 = vlaneseq
    %v278 = vshrl.u32 %v277, 7
    %v279 = vsub.s32 %v276, %v278
    %v280 = vrot.slane %v264, %v279
    %v282 = vunpack.c.l.s4 1966171168
    %v283 = vunpack.c.0.s8 %v282
    %v284 = vlaneseq
    %v285 = vshrl.u32 %v284, 7
    %v286 = vsub.s32 %v283, %v285
    %v287 = vrot.slane %v271, %v286
    %v289 = vunpack.c.l.s4 1966171168
    %v290 = vunpack.c.0.s8 %v289
    %v291 = vlaneseq
    %v292 = vshrl.u32 %v291, 7
    %v293 = vsub.s32 %v290, %v292
    %v294 = vrot.slane %v272, %v293
    %v296 = vunpack.c.l.s4 1966171168
    %v297 = vunpack.c.0.s8 %v296
    %v298 = vlaneseq
    %v299 = vshrl.u32 %v298, 7
    %v300 = vsub.s32 %v297, %v299
    %v301 = vrot.slane %v273, %v300
    %v302 = vcombine.high %v280, %v280
    %v303 = vcombine.high %v287, %v287
    %v304 = vcombine.high %v294, %v294
    %v305 = vcombine.high %v301, %v301
    %314 = vst.msk [vmem:[#allocation2 + $0x1] sm:$0x1] %vm172, %v280
    %315 = vst.msk [vmem:[#allocation2 + $0x3] sm:$0x1] %vm172, %v294
    %316 = vst.msk [vmem:[#allocation2 + $0x5] sm:$0x1] %vm172, %v302
    %317 = vst.msk [vmem:[#allocation2 + $0x7] sm:$0x1] %vm172, %v304
    %318 = vst.msk [vmem:[#allocation2 + $0x9] sm:$0x1] %vm172, %v287
    %319 = vst.msk [vmem:[#allocation2 + $0xb] sm:$0x1] %vm172, %v301
    %320 = vst.msk [vmem:[#allocation2 + $0xd] sm:$0x1] %vm172, %v303
    %321 = vst.msk [vmem:[#allocation2 + $0xf] sm:$0x1] %vm172, %v305
    %v322 = vld [vmem:[%s2] sm:$0xff]
    %v323 = vld [vmem:[%s2 + $0x8] sm:$0xff]
    %v324 = vld [vmem:[%s2 + $0x10] sm:$0xff]
    %v325 = vld [vmem:[%s2 + $0x18] sm:$0xff]
    %v326 = vld [vmem:[%s4] sm:$0x1]
    %v327 = vld [vmem:[#allocation2] sm:$0x3]
    %vm328 = vcmask 261120
    %v330 = vsel %vm328, 0.0, 0
    %332 = vmatprep.subr.mxu0 0.0
    %333 = vmatpush1.msra.mxu0 %v322
    %334 = vmatprep.subr.mxu0 0.0
    %335 = vmatpush1.msra.mxu0 %v323
    %336 = vmatprep.subr.mxu0 0.0
    %337 = vmatpush1.msra.mxu0 %v324
    %338 = vmatprep.subr.mxu0 0.0
    %339 = vmatpush1.msra.mxu0 %v325
    %340 = vmatprep.subr.mxu0 0.0
    %341 = vmatpush1.msra.mxu0 0.0
    %342 = vmatprep.subr.mxu0 0.0
    %343 = vmatpush1.msra.mxu0 0.0
    %344 = vmatprep.subr.mxu0 0.0
    %345 = vmatpush1.msra.mxu0 0.0
    %346 = vmatprep.subr.mxu0 0.0
    %347 = vmatpush1.msra.mxu0 0.0
    %348 = vmatprep.subr.mxu0 0.0
    %349 = vmatpush1.msra.mxu0 0.0
    %350 = vmatprep.subr.mxu0 0.0
    %351 = vmatpush1.msra.mxu0 0.0
    %352 = vmatprep.subr.mxu0 0.0
    %353 = vmatpush1.msra.mxu0 0.0
    %354 = vmatprep.subr.mxu0 0.0
    %355 = vmatpush1.msra.mxu0 0.0
    %356 = vmatprep.subr.mxu0 0.0
    %357 = vmatpush1.msra.mxu0 0.0
    %358 = vmatprep.subr.mxu0 0.0
    %359 = vmatpush1.msra.mxu0 0.0
    %360 = vmatprep.subr.mxu0 0.0
    %361 = vmatpush1.msra.mxu0 0.0
    %362 = vmatprep.subr.mxu0 0.0
    %363 = vmatpush1.msra.mxu0 0.0
    %364 = vmatprep.subr.mxu0 0.0
    %365 = vmatpush1.msra.mxu0 0.0
    %366 = vmatprep.subr.mxu0 0.0
    %367 = vmatpush1.msra.mxu0 0.0
    %368 = vmatprep.subr.mxu0 0.0
    %369 = vmatpush1.msra.mxu0 0.0
    %370 = vmatprep.subr.mxu0 0.0
    %371 = vmatpush1.msra.mxu0 0.0
    %372 = vmatprep.subr.mxu0 0.0
    %373 = vmatpush1.msra.mxu0 0.0
    %374 = vmatprep.subr.mxu0 0.0
    %375 = vmatpush1.msra.mxu0 0.0
    %376 = vmatprep.subr.mxu0 0.0
    %377 = vmatpush1.msra.mxu0 0.0
    %378 = vmatprep.subr.mxu0 0.0
    %379 = vmatpush1.msra.mxu0 0.0
    %380 = vmatprep.subr.mxu0 0.0
    %381 = vmatpush1.msra.mxu0 0.0
    %382 = vmatprep.subr.mxu0 0.0
    %383 = vmatpush1.msra.mxu0 0.0
    %384 = vmatprep.subr.mxu0 0.0
    %385 = vmatpush1.msra.mxu0 0.0
    %386 = vmatprep.subr.mxu0 0.0
    %387 = vmatpush1.msra.mxu0 0.0
    %388 = vmatprep.subr.mxu0 0.0
    %389 = vmatpush1.msra.mxu0 0.0
    %390 = vmatprep.subr.mxu0 0.0
    %391 = vmatpush1.msra.mxu0 0.0
    %392 = vmatprep.subr.mxu0 0.0
    %393 = vmatpush1.msra.mxu0 0.0
    %394 = vmatprep.subr.mxu0 0.0
    %395 = vmatpush1.msra.mxu0 0.0
    %396 = vmatprep.mubr.f32.mxu0 0.0
    %397 = vmatmul.mubr.f32.gmra.mrb[0].mxu0 %v330
    %v398 = vpop.f32.mrb[0].mxu0
    %v399 = vadd.f32 0.0, %v398
    %v400 = vpop.f32.mrb[0].mxu0
    %401 = vdwg.mxu0
    %v402 = vadd.f32 %v327, %v399
    %v403 = vxor.u32 %v402, 2147483648
    %v404 = vmul.f32 %v403, 1.442695
    %v405 = vpow.pop %v404
    %v406 = vadd.f32 %v405, 1.0
    %v407 = vrcp.pop %v406
    %v408 = vmul.f32 1.0, %v407
    %v410 = vlaneseq
    %v411 = vshrl.u32 %v410, 7
    %v412 = vsub.s32 0, %v411
    %v413 = vrot.slane %v326, %v412
    %414 = vrot.lane.b32.xlu0 %v413, 64
    %v415 = vpop.permute.xlu0 %414
    %v417 = vadd.f32 %v399, %v415
    %419 = vrot.lane.b32.xlu0 %v417, 64
    %v420 = vpop.permute.xlu0 %419
    %v422 = vmul.f32 %v408, %v420
    %424 = vrot.lane.b32.xlu0 %v422, 64
    %v425 = vpop.permute.xlu0 %424
    %v427 = vadd.f32 %v327, %v425
    %v428 = vtanh.pop %v427
    %v429 = vsub.f32 0.0, %v428
    %431 = vrot.lane.b32.xlu0 %v429, 96
    %v432 = vpop.permute.xlu0 %431
    %v434 = vmul.f32 %v408, %v432
    %436 = vrot.lane.b32.xlu0 %v434, 32
    %v437 = vpop.permute.xlu0 %436
    %v439 = vadd.f32 %v428, %v437
    %441 = vrot.lane.b32.xlu0 %v439, 64
    %v442 = vpop.permute.xlu0 %441
    %vm444 = vcmask 254976
    %445 = vst.msk [vmem:[#allocation3] sm:$0x3] %vm444, %v442
    %s446 = scalar_lea.vmem [#allocation2], 2
    %v447 = vld [vmem:[%s446] sm:$0x3]
    %v448 = vsel %vm328, %v442, 0
    %450 = vmatprep.subr.mxu0 0.0
    %451 = vmatpush1.msra.mxu0 %v322
    %452 = vmatprep.subr.mxu0 0.0
    %453 = vmatpush1.msra.mxu0 %v323
    %454 = vmatprep.subr.mxu0 0.0
    %455 = vmatpush1.msra.mxu0 %v324
    %456 = vmatprep.subr.mxu0 0.0
    %457 = vmatpush1.msra.mxu0 %v325
    %458 = vmatprep.subr.mxu0 0.0
    %459 = vmatpush1.msra.mxu0 0.0
    %460 = vmatprep.subr.mxu0 0.0
    %461 = vmatpush1.msra.mxu0 0.0
    %462 = vmatprep.subr.mxu0 0.0
    %463 = vmatpush1.msra.mxu0 0.0
    %464 = vmatprep.subr.mxu0 0.0
    %465 = vmatpush1.msra.mxu0 0.0
    %466 = vmatprep.subr.mxu0 0.0
    %467 = vmatpush1.msra.mxu0 0.0
    %468 = vmatprep.subr.mxu0 0.0
    %469 = vmatpush1.msra.mxu0 0.0
    %470 = vmatprep.subr.mxu0 0.0
    %471 = vmatpush1.msra.mxu0 0.0
    %472 = vmatprep.subr.mxu0 0.0
    %473 = vmatpush1.msra.mxu0 0.0
    %474 = vmatprep.subr.mxu0 0.0
    %475 = vmatpush1.msra.mxu0 0.0
    %476 = vmatprep.subr.mxu0 0.0
    %477 = vmatpush1.msra.mxu0 0.0
    %478 = vmatprep.subr.mxu0 0.0
    %479 = vmatpush1.msra.mxu0 0.0
    %480 = vmatprep.subr.mxu0 0.0
    %481 = vmatpush1.msra.mxu0 0.0
    %482 = vmatprep.subr.mxu0 0.0
    %483 = vmatpush1.msra.mxu0 0.0
    %484 = vmatprep.subr.mxu0 0.0
    %485 = vmatpush1.msra.mxu0 0.0
    %486 = vmatprep.subr.mxu0 0.0
    %487 = vmatpush1.msra.mxu0 0.0
    %488 = vmatprep.subr.mxu0 0.0
    %489 = vmatpush1.msra.mxu0 0.0
    %490 = vmatprep.subr.mxu0 0.0
    %491 = vmatpush1.msra.mxu0 0.0
    %492 = vmatprep.subr.mxu0 0.0
    %493 = vmatpush1.msra.mxu0 0.0
    %494 = vmatprep.subr.mxu0 0.0
    %495 = vmatpush1.msra.mxu0 0.0
    %496 = vmatprep.subr.mxu0 0.0
    %497 = vmatpush1.msra.mxu0 0.0
    %498 = vmatprep.subr.mxu0 0.0
    %499 = vmatpush1.msra.mxu0 0.0
    %500 = vmatprep.subr.mxu0 0.0
    %501 = vmatpush1.msra.mxu0 0.0
    %502 = vmatprep.subr.mxu0 0.0
    %503 = vmatpush1.msra.mxu0 0.0
    %504 = vmatprep.subr.mxu0 0.0
    %505 = vmatpush1.msra.mxu0 0.0
    %506 = vmatprep.subr.mxu0 0.0
    %507 = vmatpush1.msra.mxu0 0.0
    %508 = vmatprep.subr.mxu0 0.0
    %509 = vmatpush1.msra.mxu0 0.0
    %510 = vmatprep.subr.mxu0 0.0
    %511 = vmatpush1.msra.mxu0 0.0
    %512 = vmatprep.subr.mxu0 0.0
    %513 = vmatpush1.msra.mxu0 0.0
    %514 = vmatprep.mubr.f32.mxu0 0.0
    %515 = vmatmul.mubr.f32.gmra.mrb[0].mxu0 %v448
    %v516 = vpop.f32.mrb[0].mxu0
    %v517 = vadd.f32 0.0, %v516
    %v518 = vpop.f32.mrb[0].mxu0
    %519 = vdwg.mxu0
    %v520 = vadd.f32 %v447, %v517
    %v521 = vxor.u32 %v520, 2147483648
    %v522 = vmul.f32 %v521, 1.442695
    %v523 = vpow.pop %v522
    %v524 = vadd.f32 %v523, 1.0
    %v525 = vrcp.pop %v524
    %v526 = vmul.f32 1.0, %v525
    %v527 = vadd.f32 %v517, %v415
    %529 = vrot.lane.b32.xlu0 %v527, 64
    %v530 = vpop.permute.xlu0 %529
    %v532 = vmul.f32 %v526, %v530
    %534 = vrot.lane.b32.xlu0 %v532, 64
    %v535 = vpop.permute.xlu0 %534
    %v537 = vadd.f32 %v447, %v535
    %v538 = vtanh.pop %v537
    %v539 = vsub.f32 %v439, %v538
    %541 = vrot.lane.b32.xlu0 %v539, 96
    %v542 = vpop.permute.xlu0 %541
    %v544 = vmul.f32 %v526, %v542
    %546 = vrot.lane.b32.xlu0 %v544, 32
    %v547 = vpop.permute.xlu0 %546
    %v549 = vadd.f32 %v538, %v547
    %551 = vrot.lane.b32.xlu0 %v549, 64
    %v552 = vpop.permute.xlu0 %551
    %s554 = scalar_lea.vmem [#allocation3], 2
    %555 = vst.msk [vmem:[%s554] sm:$0x3] %vm444, %v552
    %s556 = scalar_lea.vmem [#allocation2], 4
    %v557 = vld [vmem:[%s556] sm:$0x3]
    %v558 = vsel %vm328, %v552, 0
    %560 = vmatprep.subr.mxu0 0.0
    %561 = vmatpush1.msra.mxu0 %v322
    %562 = vmatprep.subr.mxu0 0.0
    %563 = vmatpush1.msra.mxu0 %v323
    %564 = vmatprep.subr.mxu0 0.0
    %565 = vmatpush1.msra.mxu0 %v324
    %566 = vmatprep.subr.mxu0 0.0
    %567 = vmatpush1.msra.mxu0 %v325
    %568 = vmatprep.subr.mxu0 0.0
    %569 = vmatpush1.msra.mxu0 0.0
    %570 = vmatprep.subr.mxu0 0.0
    %571 = vmatpush1.msra.mxu0 0.0
    %572 = vmatprep.subr.mxu0 0.0
    %573 = vmatpush1.msra.mxu0 0.0
    %574 = vmatprep.subr.mxu0 0.0
    %575 = vmatpush1.msra.mxu0 0.0
    %576 = vmatprep.subr.mxu0 0.0
    %577 = vmatpush1.msra.mxu0 0.0
    %578 = vmatprep.subr.mxu0 0.0
    %579 = vmatpush1.msra.mxu0 0.0
    %580 = vmatprep.subr.mxu0 0.0
    %581 = vmatpush1.msra.mxu0 0.0
    %582 = vmatprep.subr.mxu0 0.0
    %583 = vmatpush1.msra.mxu0 0.0
    %584 = vmatprep.subr.mxu0 0.0
    %585 = vmatpush1.msra.mxu0 0.0
    %586 = vmatprep.subr.mxu0 0.0
    %587 = vmatpush1.msra.mxu0 0.0
    %588 = vmatprep.subr.mxu0 0.0
    %589 = vmatpush1.msra.mxu0 0.0
    %590 = vmatprep.subr.mxu0 0.0
    %591 = vmatpush1.msra.mxu0 0.0
    %592 = vmatprep.subr.mxu0 0.0
    %593 = vmatpush1.msra.mxu0 0.0
    %594 = vmatprep.subr.mxu0 0.0
    %595 = vmatpush1.msra.mxu0 0.0
    %596 = vmatprep.subr.mxu0 0.0
    %597 = vmatpush1.msra.mxu0 0.0
    %598 = vmatprep.subr.mxu0 0.0
    %599 = vmatpush1.msra.mxu0 0.0
    %600 = vmatprep.subr.mxu0 0.0
    %601 = vmatpush1.msra.mxu0 0.0
    %602 = vmatprep.subr.mxu0 0.0
    %603 = vmatpush1.msra.mxu0 0.0
    %604 = vmatprep.subr.mxu0 0.0
    %605 = vmatpush1.msra.mxu0 0.0
    %606 = vmatprep.subr.mxu0 0.0
    %607 = vmatpush1.msra.mxu0 0.0
    %608 = vmatprep.subr.mxu0 0.0
    %609 = vmatpush1.msra.mxu0 0.0
    %610 = vmatprep.subr.mxu0 0.0
    %611 = vmatpush1.msra.mxu0 0.0
    %612 = vmatprep.subr.mxu0 0.0
    %613 = vmatpush1.msra.mxu0 0.0
    %614 = vmatprep.subr.mxu0 0.0
    %615 = vmatpush1.msra.mxu0 0.0
    %616 = vmatprep.subr.mxu0 0.0
    %617 = vmatpush1.msra.mxu0 0.0
    %618 = vmatprep.subr.mxu0 0.0
    %619 = vmatpush1.msra.mxu0 0.0
    %620 = vmatprep.subr.mxu0 0.0
    %621 = vmatpush1.msra.mxu0 0.0
    %622 = vmatprep.subr.mxu0 0.0
    %623 = vmatpush1.msra.mxu0 0.0
    %624 = vmatprep.mubr.f32.mxu0 0.0
    %625 = vmatmul.mubr.f32.gmra.mrb[0].mxu0 %v558
    %v626 = vpop.f32.mrb[0].mxu0
    %v627 = vadd.f32 0.0, %v626
    %v628 = vpop.f32.mrb[0].mxu0
    %629 = vdwg.mxu0
    %v630 = vadd.f32 %v557, %v627
    %v631 = vxor.u32 %v630, 2147483648
    %v632 = vmul.f32 %v631, 1.442695
    %v633 = vpow.pop %v632
    %v634 = vadd.f32 %v633, 1.0
    %v635 = vrcp.pop %v634
    %v636 = vmul.f32 1.0, %v635
    %v637 = vadd.f32 %v627, %v415
    %639 = vrot.lane.b32.xlu0 %v637, 64
    %v640 = vpop.permute.xlu0 %639
    %v642 = vmul.f32 %v636, %v640
    %644 = vrot.lane.b32.xlu0 %v642, 64
    %v645 = vpop.permute.xlu0 %644
    %v647 = vadd.f32 %v557, %v645
    %v648 = vtanh.pop %v647
    %v649 = vsub.f32 %v549, %v648
    %651 = vrot.lane.b32.xlu0 %v649, 96
    %v652 = vpop.permute.xlu0 %651
    %v654 = vmul.f32 %v636, %v652
    %656 = vrot.lane.b32.xlu0 %v654, 32
    %v657 = vpop.permute.xlu0 %656
    %v659 = vadd.f32 %v648, %v657
    %661 = vrot.lane.b32.xlu0 %v659, 64
    %v662 = vpop.permute.xlu0 %661
    %s664 = scalar_lea.vmem [#allocation3], 4
    %665 = vst.msk [vmem:[%s664] sm:$0x3] %vm444, %v662
    %s666 = scalar_lea.vmem [#allocation2], 6
    %v667 = vld [vmem:[%s666] sm:$0x3]
    %v668 = vsel %vm328, %v662, 0
    %670 = vmatprep.subr.mxu0 0.0
    %671 = vmatpush1.msra.mxu0 %v322
    %672 = vmatprep.subr.mxu0 0.0
    %673 = vmatpush1.msra.mxu0 %v323
    %674 = vmatprep.subr.mxu0 0.0
    %675 = vmatpush1.msra.mxu0 %v324
    %676 = vmatprep.subr.mxu0 0.0
    %677 = vmatpush1.msra.mxu0 %v325
    %678 = vmatprep.subr.mxu0 0.0
    %679 = vmatpush1.msra.mxu0 0.0
    %680 = vmatprep.subr.mxu0 0.0
    %681 = vmatpush1.msra.mxu0 0.0
    %682 = vmatprep.subr.mxu0 0.0
    %683 = vmatpush1.msra.mxu0 0.0
    %684 = vmatprep.subr.mxu0 0.0
    %685 = vmatpush1.msra.mxu0 0.0
    %686 = vmatprep.subr.mxu0 0.0
    %687 = vmatpush1.msra.mxu0 0.0
    %688 = vmatprep.subr.mxu0 0.0
    %689 = vmatpush1.msra.mxu0 0.0
    %690 = vmatprep.subr.mxu0 0.0
    %691 = vmatpush1.msra.mxu0 0.0
    %692 = vmatprep.subr.mxu0 0.0
    %693 = vmatpush1.msra.mxu0 0.0
    %694 = vmatprep.subr.mxu0 0.0
    %695 = vmatpush1.msra.mxu0 0.0
    %696 = vmatprep.subr.mxu0 0.0
    %697 = vmatpush1.msra.mxu0 0.0
    %698 = vmatprep.subr.mxu0 0.0
    %699 = vmatpush1.msra.mxu0 0.0
    %700 = vmatprep.subr.mxu0 0.0
    %701 = vmatpush1.msra.mxu0 0.0
    %702 = vmatprep.subr.mxu0 0.0
    %703 = vmatpush1.msra.mxu0 0.0
    %704 = vmatprep.subr.mxu0 0.0
    %705 = vmatpush1.msra.mxu0 0.0
    %706 = vmatprep.subr.mxu0 0.0
    %707 = vmatpush1.msra.mxu0 0.0
    %708 = vmatprep.subr.mxu0 0.0
    %709 = vmatpush1.msra.mxu0 0.0
    %710 = vmatprep.subr.mxu0 0.0
    %711 = vmatpush1.msra.mxu0 0.0
    %712 = vmatprep.subr.mxu0 0.0
    %713 = vmatpush1.msra.mxu0 0.0
    %714 = vmatprep.subr.mxu0 0.0
    %715 = vmatpush1.msra.mxu0 0.0
    %716 = vmatprep.subr.mxu0 0.0
    %717 = vmatpush1.msra.mxu0 0.0
    %718 = vmatprep.subr.mxu0 0.0
    %719 = vmatpush1.msra.mxu0 0.0
    %720 = vmatprep.subr.mxu0 0.0
    %721 = vmatpush1.msra.mxu0 0.0
    %722 = vmatprep.subr.mxu0 0.0
    %723 = vmatpush1.msra.mxu0 0.0
    %724 = vmatprep.subr.mxu0 0.0
    %725 = vmatpush1.msra.mxu0 0.0
    %726 = vmatprep.subr.mxu0 0.0
    %727 = vmatpush1.msra.mxu0 0.0
    %728 = vmatprep.subr.mxu0 0.0
    %729 = vmatpush1.msra.mxu0 0.0
    %730 = vmatprep.subr.mxu0 0.0
    %731 = vmatpush1.msra.mxu0 0.0
    %732 = vmatprep.subr.mxu0 0.0
    %733 = vmatpush1.msra.mxu0 0.0
    %734 = vmatprep.mubr.f32.mxu0 0.0
    %735 = vmatmul.mubr.f32.gmra.mrb[0].mxu0 %v668
    %v736 = vpop.f32.mrb[0].mxu0
    %v737 = vadd.f32 0.0, %v736
    %v738 = vpop.f32.mrb[0].mxu0
    %739 = vdwg.mxu0
    %v740 = vadd.f32 %v667, %v737
    %v741 = vxor.u32 %v740, 2147483648
    %v742 = vmul.f32 %v741, 1.442695
    %v743 = vpow.pop %v742
    %v744 = vadd.f32 %v743, 1.0
    %v745 = vrcp.pop %v744
    %v746 = vmul.f32 1.0, %v745
    %v747 = vadd.f32 %v737, %v415
    %749 = vrot.lane.b32.xlu0 %v747, 64
    %v750 = vpop.permute.xlu0 %749
    %v752 = vmul.f32 %v746, %v750
    %754 = vrot.lane.b32.xlu0 %v752, 64
    %v755 = vpop.permute.xlu0 %754
    %v757 = vadd.f32 %v667, %v755
    %v758 = vtanh.pop %v757
    %v759 = vsub.f32 %v659, %v758
    %761 = vrot.lane.b32.xlu0 %v759, 96
    %v762 = vpop.permute.xlu0 %761
    %v764 = vmul.f32 %v746, %v762
    %766 = vrot.lane.b32.xlu0 %v764, 32
    %v767 = vpop.permute.xlu0 %766
    %v769 = vadd.f32 %v758, %v767
    %771 = vrot.lane.b32.xlu0 %v769, 64
    %v772 = vpop.permute.xlu0 %771
    %s774 = scalar_lea.vmem [#allocation3], 6
    %775 = vst.msk [vmem:[%s774] sm:$0x3] %vm444, %v772
    %s776 = scalar_lea.vmem [#allocation2], 8
    %v777 = vld [vmem:[%s776] sm:$0x3]
    %v778 = vsel %vm328, %v772, 0
    %780 = vmatprep.subr.mxu0 0.0
    %781 = vmatpush1.msra.mxu0 %v322
    %782 = vmatprep.subr.mxu0 0.0
    %783 = vmatpush1.msra.mxu0 %v323
    %784 = vmatprep.subr.mxu0 0.0
    %785 = vmatpush1.msra.mxu0 %v324
    %786 = vmatprep.subr.mxu0 0.0
    %787 = vmatpush1.msra.mxu0 %v325
    %788 = vmatprep.subr.mxu0 0.0
    %789 = vmatpush1.msra.mxu0 0.0
    %790 = vmatprep.subr.mxu0 0.0
    %791 = vmatpush1.msra.mxu0 0.0
    %792 = vmatprep.subr.mxu0 0.0
    %793 = vmatpush1.msra.mxu0 0.0
    %794 = vmatprep.subr.mxu0 0.0
    %795 = vmatpush1.msra.mxu0 0.0
    %796 = vmatprep.subr.mxu0 0.0
    %797 = vmatpush1.msra.mxu0 0.0
    %798 = vmatprep.subr.mxu0 0.0
    %799 = vmatpush1.msra.mxu0 0.0
    %800 = vmatprep.subr.mxu0 0.0
    %801 = vmatpush1.msra.mxu0 0.0
    %802 = vmatprep.subr.mxu0 0.0
    %803 = vmatpush1.msra.mxu0 0.0
    %804 = vmatprep.subr.mxu0 0.0
    %805 = vmatpush1.msra.mxu0 0.0
    %806 = vmatprep.subr.mxu0 0.0
    %807 = vmatpush1.msra.mxu0 0.0
    %808 = vmatprep.subr.mxu0 0.0
    %809 = vmatpush1.msra.mxu0 0.0
    %810 = vmatprep.subr.mxu0 0.0
    %811 = vmatpush1.msra.mxu0 0.0
    %812 = vmatprep.subr.mxu0 0.0
    %813 = vmatpush1.msra.mxu0 0.0
    %814 = vmatprep.subr.mxu0 0.0
    %815 = vmatpush1.msra.mxu0 0.0
    %816 = vmatprep.subr.mxu0 0.0
    %817 = vmatpush1.msra.mxu0 0.0
    %818 = vmatprep.subr.mxu0 0.0
    %819 = vmatpush1.msra.mxu0 0.0
    %820 = vmatprep.subr.mxu0 0.0
    %821 = vmatpush1.msra.mxu0 0.0
    %822 = vmatprep.subr.mxu0 0.0
    %823 = vmatpush1.msra.mxu0 0.0
    %824 = vmatprep.subr.mxu0 0.0
    %825 = vmatpush1.msra.mxu0 0.0
    %826 = vmatprep.subr.mxu0 0.0
    %827 = vmatpush1.msra.mxu0 0.0
    %828 = vmatprep.subr.mxu0 0.0
    %829 = vmatpush1.msra.mxu0 0.0
    %830 = vmatprep.subr.mxu0 0.0
    %831 = vmatpush1.msra.mxu0 0.0
    %832 = vmatprep.subr.mxu0 0.0
    %833 = vmatpush1.msra.mxu0 0.0
    %834 = vmatprep.subr.mxu0 0.0
    %835 = vmatpush1.msra.mxu0 0.0
    %836 = vmatprep.subr.mxu0 0.0
    %837 = vmatpush1.msra.mxu0 0.0
    %838 = vmatprep.subr.mxu0 0.0
    %839 = vmatpush1.msra.mxu0 0.0
    %840 = vmatprep.subr.mxu0 0.0
    %841 = vmatpush1.msra.mxu0 0.0
    %842 = vmatprep.subr.mxu0 0.0
    %843 = vmatpush1.msra.mxu0 0.0
    %844 = vmatprep.mubr.f32.mxu0 0.0
    %845 = vmatmul.mubr.f32.gmra.mrb[0].mxu0 %v778
    %v846 = vpop.f32.mrb[0].mxu0
    %v847 = vadd.f32 0.0, %v846
    %v848 = vpop.f32.mrb[0].mxu0
    %849 = vdwg.mxu0
    %v850 = vadd.f32 %v777, %v847
    %v851 = vxor.u32 %v850, 2147483648
    %v852 = vmul.f32 %v851, 1.442695
    %v853 = vpow.pop %v852
    %v854 = vadd.f32 %v853, 1.0
    %v855 = vrcp.pop %v854
    %v856 = vmul.f32 1.0, %v855
    %v857 = vadd.f32 %v847, %v415
    %859 = vrot.lane.b32.xlu0 %v857, 64
    %v860 = vpop.permute.xlu0 %859
    %v862 = vmul.f32 %v856, %v860
    %864 = vrot.lane.b32.xlu0 %v862, 64
    %v865 = vpop.permute.xlu0 %864
    %v867 = vadd.f32 %v777, %v865
    %v868 = vtanh.pop %v867
    %v869 = vsub.f32 %v769, %v868
    %871 = vrot.lane.b32.xlu0 %v869, 96
    %v872 = vpop.permute.xlu0 %871
    %v874 = vmul.f32 %v856, %v872
    %876 = vrot.lane.b32.xlu0 %v874, 32
    %v877 = vpop.permute.xlu0 %876
    %v879 = vadd.f32 %v868, %v877
    %881 = vrot.lane.b32.xlu0 %v879, 64
    %v882 = vpop.permute.xlu0 %881
    %s884 = scalar_lea.vmem [#allocation3], 8
    %885 = vst.msk [vmem:[%s884] sm:$0x3] %vm444, %v882
    %s886 = scalar_lea.vmem [#allocation2], 10
    %v887 = vld [vmem:[%s886] sm:$0x3]
    %v888 = vsel %vm328, %v882, 0
    %890 = vmatprep.subr.mxu0 0.0
    %891 = vmatpush1.msra.mxu0 %v322
    %892 = vmatprep.subr.mxu0 0.0
    %893 = vmatpush1.msra.mxu0 %v323
    %894 = vmatprep.subr.mxu0 0.0
    %895 = vmatpush1.msra.mxu0 %v324
    %896 = vmatprep.subr.mxu0 0.0
    %897 = vmatpush1.msra.mxu0 %v325
    %898 = vmatprep.subr.mxu0 0.0
    %899 = vmatpush1.msra.mxu0 0.0
    %900 = vmatprep.subr.mxu0 0.0
    %901 = vmatpush1.msra.mxu0 0.0
    %902 = vmatprep.subr.mxu0 0.0
    %903 = vmatpush1.msra.mxu0 0.0
    %904 = vmatprep.subr.mxu0 0.0
    %905 = vmatpush1.msra.mxu0 0.0
    %906 = vmatprep.subr.mxu0 0.0
    %907 = vmatpush1.msra.mxu0 0.0
    %908 = vmatprep.subr.mxu0 0.0
    %909 = vmatpush1.msra.mxu0 0.0
    %910 = vmatprep.subr.mxu0 0.0
    %911 = vmatpush1.msra.mxu0 0.0
    %912 = vmatprep.subr.mxu0 0.0
    %913 = vmatpush1.msra.mxu0 0.0
    %914 = vmatprep.subr.mxu0 0.0
    %915 = vmatpush1.msra.mxu0 0.0
    %916 = vmatprep.subr.mxu0 0.0
    %917 = vmatpush1.msra.mxu0 0.0
    %918 = vmatprep.subr.mxu0 0.0
    %919 = vmatpush1.msra.mxu0 0.0
    %920 = vmatprep.subr.mxu0 0.0
    %921 = vmatpush1.msra.mxu0 0.0
    %922 = vmatprep.subr.mxu0 0.0
    %923 = vmatpush1.msra.mxu0 0.0
    %924 = vmatprep.subr.mxu0 0.0
    %925 = vmatpush1.msra.mxu0 0.0
    %926 = vmatprep.subr.mxu0 0.0
    %927 = vmatpush1.msra.mxu0 0.0
    %928 = vmatprep.subr.mxu0 0.0
    %929 = vmatpush1.msra.mxu0 0.0
    %930 = vmatprep.subr.mxu0 0.0
    %931 = vmatpush1.msra.mxu0 0.0
    %932 = vmatprep.subr.mxu0 0.0
    %933 = vmatpush1.msra.mxu0 0.0
    %934 = vmatprep.subr.mxu0 0.0
    %935 = vmatpush1.msra.mxu0 0.0
    %936 = vmatprep.subr.mxu0 0.0
    %937 = vmatpush1.msra.mxu0 0.0
    %938 = vmatprep.subr.mxu0 0.0
    %939 = vmatpush1.msra.mxu0 0.0
    %940 = vmatprep.subr.mxu0 0.0
    %941 = vmatpush1.msra.mxu0 0.0
    %942 = vmatprep.subr.mxu0 0.0
    %943 = vmatpush1.msra.mxu0 0.0
    %944 = vmatprep.subr.mxu0 0.0
    %945 = vmatpush1.msra.mxu0 0.0
    %946 = vmatprep.subr.mxu0 0.0
    %947 = vmatpush1.msra.mxu0 0.0
    %948 = vmatprep.subr.mxu0 0.0
    %949 = vmatpush1.msra.mxu0 0.0
    %950 = vmatprep.subr.mxu0 0.0
    %951 = vmatpush1.msra.mxu0 0.0
    %952 = vmatprep.subr.mxu0 0.0
    %953 = vmatpush1.msra.mxu0 0.0
    %954 = vmatprep.mubr.f32.mxu0 0.0
    %955 = vmatmul.mubr.f32.gmra.mrb[0].mxu0 %v888
    %v956 = vpop.f32.mrb[0].mxu0
    %v957 = vadd.f32 0.0, %v956
    %v958 = vpop.f32.mrb[0].mxu0
    %959 = vdwg.mxu0
    %v960 = vadd.f32 %v887, %v957
    %v961 = vxor.u32 %v960, 2147483648
    %v962 = vmul.f32 %v961, 1.442695
    %v963 = vpow.pop %v962
    %v964 = vadd.f32 %v963, 1.0
    %v965 = vrcp.pop %v964
    %v966 = vmul.f32 1.0, %v965
    %v967 = vadd.f32 %v957, %v415
    %969 = vrot.lane.b32.xlu0 %v967, 64
    %v970 = vpop.permute.xlu0 %969
    %v972 = vmul.f32 %v966, %v970
    %974 = vrot.lane.b32.xlu0 %v972, 64
    %v975 = vpop.permute.xlu0 %974
    %v977 = vadd.f32 %v887, %v975
    %v978 = vtanh.pop %v977
    %v979 = vsub.f32 %v879, %v978
    %981 = vrot.lane.b32.xlu0 %v979, 96
    %v982 = vpop.permute.xlu0 %981
    %v984 = vmul.f32 %v966, %v982
    %986 = vrot.lane.b32.xlu0 %v984, 32
    %v987 = vpop.permute.xlu0 %986
    %v989 = vadd.f32 %v978, %v987
    %991 = vrot.lane.b32.xlu0 %v989, 64
    %v992 = vpop.permute.xlu0 %991
    %s994 = scalar_lea.vmem [#allocation3], 10
    %995 = vst.msk [vmem:[%s994] sm:$0x3] %vm444, %v992
    %s996 = scalar_lea.vmem [#allocation2], 12
    %v997 = vld [vmem:[%s996] sm:$0x3]
    %v998 = vsel %vm328, %v992, 0
    %1000 = vmatprep.subr.mxu0 0.0
    %1001 = vmatpush1.msra.mxu0 %v322
    %1002 = vmatprep.subr.mxu0 0.0
    %1003 = vmatpush1.msra.mxu0 %v323
    %1004 = vmatprep.subr.mxu0 0.0
    %1005 = vmatpush1.msra.mxu0 %v324
    %1006 = vmatprep.subr.mxu0 0.0
    %1007 = vmatpush1.msra.mxu0 %v325
    %1008 = vmatprep.subr.mxu0 0.0
    %1009 = vmatpush1.msra.mxu0 0.0
    %1010 = vmatprep.subr.mxu0 0.0
    %1011 = vmatpush1.msra.mxu0 0.0
    %1012 = vmatprep.subr.mxu0 0.0
    %1013 = vmatpush1.msra.mxu0 0.0
    %1014 = vmatprep.subr.mxu0 0.0
    %1015 = vmatpush1.msra.mxu0 0.0
    %1016 = vmatprep.subr.mxu0 0.0
    %1017 = vmatpush1.msra.mxu0 0.0
    %1018 = vmatprep.subr.mxu0 0.0
    %1019 = vmatpush1.msra.mxu0 0.0
    %1020 = vmatprep.subr.mxu0 0.0
    %1021 = vmatpush1.msra.mxu0 0.0
    %1022 = vmatprep.subr.mxu0 0.0
    %1023 = vmatpush1.msra.mxu0 0.0
    %1024 = vmatprep.subr.mxu0 0.0
    %1025 = vmatpush1.msra.mxu0 0.0
    %1026 = vmatprep.subr.mxu0 0.0
    %1027 = vmatpush1.msra.mxu0 0.0
    %1028 = vmatprep.subr.mxu0 0.0
    %1029 = vmatpush1.msra.mxu0 0.0
    %1030 = vmatprep.subr.mxu0 0.0
    %1031 = vmatpush1.msra.mxu0 0.0
    %1032 = vmatprep.subr.mxu0 0.0
    %1033 = vmatpush1.msra.mxu0 0.0
    %1034 = vmatprep.subr.mxu0 0.0
    %1035 = vmatpush1.msra.mxu0 0.0
    %1036 = vmatprep.subr.mxu0 0.0
    %1037 = vmatpush1.msra.mxu0 0.0
    %1038 = vmatprep.subr.mxu0 0.0
    %1039 = vmatpush1.msra.mxu0 0.0
    %1040 = vmatprep.subr.mxu0 0.0
    %1041 = vmatpush1.msra.mxu0 0.0
    %1042 = vmatprep.subr.mxu0 0.0
    %1043 = vmatpush1.msra.mxu0 0.0
    %1044 = vmatprep.subr.mxu0 0.0
    %1045 = vmatpush1.msra.mxu0 0.0
    %1046 = vmatprep.subr.mxu0 0.0
    %1047 = vmatpush1.msra.mxu0 0.0
    %1048 = vmatprep.subr.mxu0 0.0
    %1049 = vmatpush1.msra.mxu0 0.0
    %1050 = vmatprep.subr.mxu0 0.0
    %1051 = vmatpush1.msra.mxu0 0.0
    %1052 = vmatprep.subr.mxu0 0.0
    %1053 = vmatpush1.msra.mxu0 0.0
    %1054 = vmatprep.subr.mxu0 0.0
    %1055 = vmatpush1.msra.mxu0 0.0
    %1056 = vmatprep.subr.mxu0 0.0
    %1057 = vmatpush1.msra.mxu0 0.0
    %1058 = vmatprep.subr.mxu0 0.0
    %1059 = vmatpush1.msra.mxu0 0.0
    %1060 = vmatprep.subr.mxu0 0.0
    %1061 = vmatpush1.msra.mxu0 0.0
    %1062 = vmatprep.subr.mxu0 0.0
    %1063 = vmatpush1.msra.mxu0 0.0
    %1064 = vmatprep.mubr.f32.mxu0 0.0
    %1065 = vmatmul.mubr.f32.gmra.mrb[0].mxu0 %v998
    %v1066 = vpop.f32.mrb[0].mxu0
    %v1067 = vadd.f32 0.0, %v1066
    %v1068 = vpop.f32.mrb[0].mxu0
    %1069 = vdwg.mxu0
    %v1070 = vadd.f32 %v997, %v1067
    %v1071 = vxor.u32 %v1070, 2147483648
    %v1072 = vmul.f32 %v1071, 1.442695
    %v1073 = vpow.pop %v1072
    %v1074 = vadd.f32 %v1073, 1.0
    %v1075 = vrcp.pop %v1074
    %v1076 = vmul.f32 1.0, %v1075
    %v1077 = vadd.f32 %v1067, %v415
    %1079 = vrot.lane.b32.xlu0 %v1077, 64
    %v1080 = vpop.permute.xlu0 %1079
    %v1082 = vmul.f32 %v1076, %v1080
    %1084 = vrot.lane.b32.xlu0 %v1082, 64
    %v1085 = vpop.permute.xlu0 %1084
    %v1087 = vadd.f32 %v997, %v1085
    %v1088 = vtanh.pop %v1087
    %v1089 = vsub.f32 %v989, %v1088
    %1091 = vrot.lane.b32.xlu0 %v1089, 96
    %v1092 = vpop.permute.xlu0 %1091
    %v1094 = vmul.f32 %v1076, %v1092
    %1096 = vrot.lane.b32.xlu0 %v1094, 32
    %v1097 = vpop.permute.xlu0 %1096
    %v1099 = vadd.f32 %v1088, %v1097
    %1101 = vrot.lane.b32.xlu0 %v1099, 64
    %v1102 = vpop.permute.xlu0 %1101
    %s1104 = scalar_lea.vmem [#allocation3], 12
    %1105 = vst.msk [vmem:[%s1104] sm:$0x3] %vm444, %v1102
    %s1106 = scalar_lea.vmem [#allocation2], 14
    %v1107 = vld [vmem:[%s1106] sm:$0x3]
    %v1108 = vsel %vm328, %v1102, 0
    %1110 = vmatprep.subr.mxu0 0.0
    %1111 = vmatpush1.msra.mxu0 %v322
    %1112 = vmatprep.subr.mxu0 0.0
    %1113 = vmatpush1.msra.mxu0 %v323
    %1114 = vmatprep.subr.mxu0 0.0
    %1115 = vmatpush1.msra.mxu0 %v324
    %1116 = vmatprep.subr.mxu0 0.0
    %1117 = vmatpush1.msra.mxu0 %v325
    %1118 = vmatprep.subr.mxu0 0.0
    %1119 = vmatpush1.msra.mxu0 0.0
    %1120 = vmatprep.subr.mxu0 0.0
    %1121 = vmatpush1.msra.mxu0 0.0
    %1122 = vmatprep.subr.mxu0 0.0
    %1123 = vmatpush1.msra.mxu0 0.0
    %1124 = vmatprep.subr.mxu0 0.0
    %1125 = vmatpush1.msra.mxu0 0.0
    %1126 = vmatprep.subr.mxu0 0.0
    %1127 = vmatpush1.msra.mxu0 0.0
    %1128 = vmatprep.subr.mxu0 0.0
    %1129 = vmatpush1.msra.mxu0 0.0
    %1130 = vmatprep.subr.mxu0 0.0
    %1131 = vmatpush1.msra.mxu0 0.0
    %1132 = vmatprep.subr.mxu0 0.0
    %1133 = vmatpush1.msra.mxu0 0.0
    %1134 = vmatprep.subr.mxu0 0.0
    %1135 = vmatpush1.msra.mxu0 0.0
    %1136 = vmatprep.subr.mxu0 0.0
    %1137 = vmatpush1.msra.mxu0 0.0
    %1138 = vmatprep.subr.mxu0 0.0
    %1139 = vmatpush1.msra.mxu0 0.0
    %1140 = vmatprep.subr.mxu0 0.0
    %1141 = vmatpush1.msra.mxu0 0.0
    %1142 = vmatprep.subr.mxu0 0.0
    %1143 = vmatpush1.msra.mxu0 0.0
    %1144 = vmatprep.subr.mxu0 0.0
    %1145 = vmatpush1.msra.mxu0 0.0
    %1146 = vmatprep.subr.mxu0 0.0
    %1147 = vmatpush1.msra.mxu0 0.0
    %1148 = vmatprep.subr.mxu0 0.0
    %1149 = vmatpush1.msra.mxu0 0.0
    %1150 = vmatprep.subr.mxu0 0.0
    %1151 = vmatpush1.msra.mxu0 0.0
    %1152 = vmatprep.subr.mxu0 0.0
    %1153 = vmatpush1.msra.mxu0 0.0
    %1154 = vmatprep.subr.mxu0 0.0
    %1155 = vmatpush1.msra.mxu0 0.0
    %1156 = vmatprep.subr.mxu0 0.0
    %1157 = vmatpush1.msra.mxu0 0.0
    %1158 = vmatprep.subr.mxu0 0.0
    %1159 = vmatpush1.msra.mxu0 0.0
    %1160 = vmatprep.subr.mxu0 0.0
    %1161 = vmatpush1.msra.mxu0 0.0
    %1162 = vmatprep.subr.mxu0 0.0
    %1163 = vmatpush1.msra.mxu0 0.0
    %1164 = vmatprep.subr.mxu0 0.0
    %1165 = vmatpush1.msra.mxu0 0.0
    %1166 = vmatprep.subr.mxu0 0.0
    %1167 = vmatpush1.msra.mxu0 0.0
    %1168 = vmatprep.subr.mxu0 0.0
    %1169 = vmatpush1.msra.mxu0 0.0
    %1170 = vmatprep.subr.mxu0 0.0
    %1171 = vmatpush1.msra.mxu0 0.0
    %1172 = vmatprep.subr.mxu0 0.0
    %1173 = vmatpush1.msra.mxu0 0.0
    %1174 = vmatprep.mubr.f32.mxu0 0.0
    %1175 = vmatmul.mubr.f32.gmra.mrb[0].mxu0 %v1108
    %v1176 = vpop.f32.mrb[0].mxu0
    %v1177 = vadd.f32 0.0, %v1176
    %v1178 = vpop.f32.mrb[0].mxu0
    %1179 = vdwg.mxu0
    %v1180 = vadd.f32 %v1107, %v1177
    %v1181 = vxor.u32 %v1180, 2147483648
    %v1182 = vmul.f32 %v1181, 1.442695
    %v1183 = vpow.pop %v1182
    %v1184 = vadd.f32 %v1183, 1.0
    %v1185 = vrcp.pop %v1184
    %v1186 = vmul.f32 1.0, %v1185
    %v1187 = vadd.f32 %v1177, %v415
    %1189 = vrot.lane.b32.xlu0 %v1187, 64
    %v1190 = vpop.permute.xlu0 %1189
    %v1192 = vmul.f32 %v1186, %v1190
    %1194 = vrot.lane.b32.xlu0 %v1192, 64
    %v1195 = vpop.permute.xlu0 %1194
    %v1197 = vadd.f32 %v1107, %v1195
    %v1198 = vtanh.pop %v1197
    %v1199 = vsub.f32 %v1099, %v1198
    %1201 = vrot.lane.b32.xlu0 %v1199, 96
    %v1202 = vpop.permute.xlu0 %1201
    %v1204 = vmul.f32 %v1186, %v1202
    %1206 = vrot.lane.b32.xlu0 %v1204, 32
    %v1207 = vpop.permute.xlu0 %1206
    %v1209 = vadd.f32 %v1198, %v1207
    %1211 = vrot.lane.b32.xlu0 %v1209, 64
    %v1212 = vpop.permute.xlu0 %1211
    %s1214 = scalar_lea.vmem [#allocation3], 14
    %1215 = vst.msk [vmem:[%s1214] sm:$0x3] %vm444, %v1212
    %v1216 = vld [vmem:[#allocation3] sm:$0x3]
    %v1217 = vld [vmem:[#allocation3 + $0x2] sm:$0x3]
    %v1218 = vld [vmem:[#allocation3 + $0x4] sm:$0x3]
    %v1219 = vld [vmem:[#allocation3 + $0x6] sm:$0x3]
    %v1220 = vld [vmem:[#allocation3 + $0x8] sm:$0x3]
    %v1221 = vld [vmem:[#allocation3 + $0xa] sm:$0x3]
    %v1222 = vld [vmem:[#allocation3 + $0xc] sm:$0x3]
    %v1223 = vld [vmem:[#allocation3 + $0xe] sm:$0x3]
    %v1224 = vld [vmem:[%s5] sm:$0xff]
    %v1225 = vld [vmem:[%s5 + $0x8] sm:$0xff]
    %v1226 = vld [vmem:[%s5 + $0x10] sm:$0xff]
    %v1227 = vld [vmem:[%s5 + $0x18] sm:$0xff]
    %v1228 = vld [vmem:[%s6] sm:$0x1]
    %v1230 = vlaneseq
    %v1231 = vshrl.u32 %v1230, 7
    %v1232 = vsub.s32 0, %v1231
    %v1233 = vrot.slane %v1228, %v1232
    %v1243 = vrot.slane %v1217, 7
    %vm1244 = vcmask 1041409
    %v1245 = vsel %vm1244, %v1243, %v1216
    %v1246 = vrot.slane %v1218, 6
    %vm1247 = vcmask 1042434
    %v1248 = vsel %vm1247, %v1246, %v1245
    %v1249 = vrot.slane %v1219, 5
    %vm1250 = vcmask 1043459
    %v1251 = vsel %vm1250, %v1249, %v1248
    %v1252 = vrot.slane %v1220, 4
    %vm1253 = vcmask 1044484
    %v1254 = vsel %vm1253, %v1252, %v1251
    %v1255 = vrot.slane %v1221, 3
    %vm1256 = vcmask 1045509
    %v1257 = vsel %vm1256, %v1255, %v1254
    %v1258 = vrot.slane %v1222, 2
    %vm1259 = vcmask 1046534
    %v1260 = vsel %vm1259, %v1258, %v1257
    %v1261 = vrot.slane %v1223, 1
    %vm1262 = vcmask 1047559
    %v1263 = vsel %vm1262, %v1261, %v1260
    %v1264 = vsel %vm328, %v1263, 0
    %1266 = vmatprep.subr.mxu0 0.0
    %1267 = vmatpush1.msra.mxu0 %v1224
    %1268 = vmatprep.subr.mxu0 0.0
    %1269 = vmatpush1.msra.mxu0 %v1225
    %1270 = vmatprep.subr.mxu0 0.0
    %1271 = vmatpush1.msra.mxu0 %v1226
    %1272 = vmatprep.subr.mxu0 0.0
    %1273 = vmatpush1.msra.mxu0 %v1227
    %1274 = vmatprep.subr.mxu0 0.0
    %1275 = vmatpush1.msra.mxu0 0.0
    %1276 = vmatprep.subr.mxu0 0.0
    %1277 = vmatpush1.msra.mxu0 0.0
    %1278 = vmatprep.subr.mxu0 0.0
    %1279 = vmatpush1.msra.mxu0 0.0
    %1280 = vmatprep.subr.mxu0 0.0
    %1281 = vmatpush1.msra.mxu0 0.0
    %1282 = vmatprep.subr.mxu0 0.0
    %1283 = vmatpush1.msra.mxu0 0.0
    %1284 = vmatprep.subr.mxu0 0.0
    %1285 = vmatpush1.msra.mxu0 0.0
    %1286 = vmatprep.subr.mxu0 0.0
    %1287 = vmatpush1.msra.mxu0 0.0
    %1288 = vmatprep.subr.mxu0 0.0
    %1289 = vmatpush1.msra.mxu0 0.0
    %1290 = vmatprep.subr.mxu0 0.0
    %1291 = vmatpush1.msra.mxu0 0.0
    %1292 = vmatprep.subr.mxu0 0.0
    %1293 = vmatpush1.msra.mxu0 0.0
    %1294 = vmatprep.subr.mxu0 0.0
    %1295 = vmatpush1.msra.mxu0 0.0
    %1296 = vmatprep.subr.mxu0 0.0
    %1297 = vmatpush1.msra.mxu0 0.0
    %1298 = vmatprep.subr.mxu0 0.0
    %1299 = vmatpush1.msra.mxu0 0.0
    %1300 = vmatprep.subr.mxu0 0.0
    %1301 = vmatpush1.msra.mxu0 0.0
    %1302 = vmatprep.subr.mxu0 0.0
    %1303 = vmatpush1.msra.mxu0 0.0
    %1304 = vmatprep.subr.mxu0 0.0
    %1305 = vmatpush1.msra.mxu0 0.0
    %1306 = vmatprep.subr.mxu0 0.0
    %1307 = vmatpush1.msra.mxu0 0.0
    %1308 = vmatprep.subr.mxu0 0.0
    %1309 = vmatpush1.msra.mxu0 0.0
    %1310 = vmatprep.subr.mxu0 0.0
    %1311 = vmatpush1.msra.mxu0 0.0
    %1312 = vmatprep.subr.mxu0 0.0
    %1313 = vmatpush1.msra.mxu0 0.0
    %1314 = vmatprep.subr.mxu0 0.0
    %1315 = vmatpush1.msra.mxu0 0.0
    %1316 = vmatprep.subr.mxu0 0.0
    %1317 = vmatpush1.msra.mxu0 0.0
    %1318 = vmatprep.subr.mxu0 0.0
    %1319 = vmatpush1.msra.mxu0 0.0
    %1320 = vmatprep.subr.mxu0 0.0
    %1321 = vmatpush1.msra.mxu0 0.0
    %1322 = vmatprep.subr.mxu0 0.0
    %1323 = vmatpush1.msra.mxu0 0.0
    %1324 = vmatprep.subr.mxu0 0.0
    %1325 = vmatpush1.msra.mxu0 0.0
    %1326 = vmatprep.subr.mxu0 0.0
    %1327 = vmatpush1.msra.mxu0 0.0
    %1328 = vmatprep.subr.mxu0 0.0
    %1329 = vmatpush1.msra.mxu0 0.0
    %1330 = vmatprep.mubr.f32.mxu0 0.0
    %1331 = vmatmul.mubr.f32.gmra.mrb[0].mxu0 %v1264
    %v1332 = vpop.f32.mrb[0].mxu0
    %v1333 = vadd.f32 %v1233, %v1332
    %v1334 = vpop.f32.mrb[0].mxu0
    %1335 = vdwg.mxu0
    %vm1336 = vcmask 97280
    %1337 = vst.msk [vmem:[#allocation4] sm:$0xff] %vm1336, %v1333
    %v1338 = vrot.slane %v1216, 1
    %v1339 = vsel %vm1244, %v1217, %v1338
    %v1340 = vrot.slane %v1218, 7
    %v1341 = vsel %vm1247, %v1340, %v1339
    %v1342 = vrot.slane %v1219, 6
    %v1343 = vsel %vm1250, %v1342, %v1341
    %v1344 = vrot.slane %v1220, 5
    %v1345 = vsel %vm1253, %v1344, %v1343
    %v1346 = vrot.slane %v1221, 4
    %v1347 = vsel %vm1256, %v1346, %v1345
    %v1348 = vrot.slane %v1222, 3
    %v1349 = vsel %vm1259, %v1348, %v1347
    %v1350 = vrot.slane %v1223, 2
    %v1351 = vsel %vm1262, %v1350, %v1349
    %v1352 = vsel %vm328, %v1351, 0
    %1354 = vmatprep.subr.mxu0 0.0
    %1355 = vmatpush1.msra.mxu0 %v1224
    %1356 = vmatprep.subr.mxu0 0.0
    %1357 = vmatpush1.msra.mxu0 %v1225
    %1358 = vmatprep.subr.mxu0 0.0
    %1359 = vmatpush1.msra.mxu0 %v1226
    %1360 = vmatprep.subr.mxu0 0.0
    %1361 = vmatpush1.msra.mxu0 %v1227
    %1362 = vmatprep.subr.mxu0 0.0
    %1363 = vmatpush1.msra.mxu0 0.0
    %1364 = vmatprep.subr.mxu0 0.0
    %1365 = vmatpush1.msra.mxu0 0.0
    %1366 = vmatprep.subr.mxu0 0.0
    %1367 = vmatpush1.msra.mxu0 0.0
    %1368 = vmatprep.subr.mxu0 0.0
    %1369 = vmatpush1.msra.mxu0 0.0
    %1370 = vmatprep.subr.mxu0 0.0
    %1371 = vmatpush1.msra.mxu0 0.0
    %1372 = vmatprep.subr.mxu0 0.0
    %1373 = vmatpush1.msra.mxu0 0.0
    %1374 = vmatprep.subr.mxu0 0.0
    %1375 = vmatpush1.msra.mxu0 0.0
    %1376 = vmatprep.subr.mxu0 0.0
    %1377 = vmatpush1.msra.mxu0 0.0
    %1378 = vmatprep.subr.mxu0 0.0
    %1379 = vmatpush1.msra.mxu0 0.0
    %1380 = vmatprep.subr.mxu0 0.0
    %1381 = vmatpush1.msra.mxu0 0.0
    %1382 = vmatprep.subr.mxu0 0.0
    %1383 = vmatpush1.msra.mxu0 0.0
    %1384 = vmatprep.subr.mxu0 0.0
    %1385 = vmatpush1.msra.mxu0 0.0
    %1386 = vmatprep.subr.mxu0 0.0
    %1387 = vmatpush1.msra.mxu0 0.0
    %1388 = vmatprep.subr.mxu0 0.0
    %1389 = vmatpush1.msra.mxu0 0.0
    %1390 = vmatprep.subr.mxu0 0.0
    %1391 = vmatpush1.msra.mxu0 0.0
    %1392 = vmatprep.subr.mxu0 0.0
    %1393 = vmatpush1.msra.mxu0 0.0
    %1394 = vmatprep.subr.mxu0 0.0
    %1395 = vmatpush1.msra.mxu0 0.0
    %1396 = vmatprep.subr.mxu0 0.0
    %1397 = vmatpush1.msra.mxu0 0.0
    %1398 = vmatprep.subr.mxu0 0.0
    %1399 = vmatpush1.msra.mxu0 0.0
    %1400 = vmatprep.subr.mxu0 0.0
    %1401 = vmatpush1.msra.mxu0 0.0
    %1402 = vmatprep.subr.mxu0 0.0
    %1403 = vmatpush1.msra.mxu0 0.0
    %1404 = vmatprep.subr.mxu0 0.0
    %1405 = vmatpush1.msra.mxu0 0.0
    %1406 = vmatprep.subr.mxu0 0.0
    %1407 = vmatpush1.msra.mxu0 0.0
    %1408 = vmatprep.subr.mxu0 0.0
    %1409 = vmatpush1.msra.mxu0 0.0
    %1410 = vmatprep.subr.mxu0 0.0
    %1411 = vmatpush1.msra.mxu0 0.0
    %1412 = vmatprep.subr.mxu0 0.0
    %1413 = vmatpush1.msra.mxu0 0.0
    %1414 = vmatprep.subr.mxu0 0.0
    %1415 = vmatpush1.msra.mxu0 0.0
    %1416 = vmatprep.subr.mxu0 0.0
    %1417 = vmatpush1.msra.mxu0 0.0
    %1418 = vmatprep.mubr.f32.mxu0 0.0
    %1419 = vmatmul.mubr.f32.gmra.mrb[0].mxu0 %v1352
    %v1420 = vpop.f32.mrb[0].mxu0
    %v1421 = vadd.f32 %v1233, %v1420
    %v1422 = vpop.f32.mrb[0].mxu0
    %1423 = vdwg.mxu0
    %s1424 = scalar_lea.vmem [#allocation4], 8
    %1425 = vst.msk [vmem:[%s1424] sm:$0xff] %vm1336, %v1421
    // Predicated region
    $region30: #{decoder_legacy_forward.1} parent=1 // pred_check
      _
    $region31: #{decoder_legacy_forward.1} parent=1 // pred_check_branch
      %1427 = sbr.rel (0) target = $region33
    $region32: #{decoder_legacy_forward.1} parent=1 // pred_region
      %s1429 = ssub.s32 256, 256
      %1430 = vsyncadd [#allocation5], %s1429
      %s1431 = sshll.u32 [#allocation4], 4
      %s1432 = int_to_ptr.vmem [resolvable:$true] %s1431
      %1437 = dma.vmem_to_hbm [thread:$0]  %s1432, 256, %s7, [#allocation5], 128, 128, 8
    $region33: #{decoder_legacy_forward.1} parent=1 // pred_fallthru
      _
    // Predicated region
    $region34: #{decoder_legacy_forward.1} parent=1 // pred_check
      _
    $region35: #{decoder_legacy_forward.1} parent=1 // pred_check_branch
      %1439 = sbr.rel (0) target = $region37
    $region36: #{decoder_legacy_forward.1} parent=1 // pred_region
      %1440 = dma.done [#allocation5], 256
    $region37: #{decoder_legacy_forward.1} parent=1 // pred_fallthru
      _
    %1441 = vsyncpa [#allocation5], 1

</llo_original>
